<compile_context>
chip_gen: v5e
topology: v5e:2x2
jax: 0.10.0
libtpu: 0.0.40
codegen_flags: <defaults>
</compile_context>

<pallas_src>
import functools

import numpy as np
import jax
import jax.numpy as jnp
from jax import lax
from jax.experimental import pallas as pl
from jax.experimental.pallas import tpu as pltpu

NEG_SLOPE = 0.2   # _activation('lrelu') == nn.LeakyReLU(0.2)
BN_EPS = 1e-5


# --------------------------------------------------------------------------
# Fused Pallas kernel.
# --------------------------------------------------------------------------
def _fused_kernel(f1_ref, f2_ref, w1_ref, wup_ref, w34_ref, pk_ref, pf_ref, pb_ref,
                  o_ref, y1p_ref, y2asm_ref,
                  *, n, k1, ho, wo, c, hin2, win2, cin2, win1, cin1):
    f32 = jnp.float32
    dc = wo * c                      # dense lane width of one output slab
    rows_o = n * ho                  # output rows (n, oy)
    rows_u = n * hin2                # upconv-phase rows (n, iy)

    # ---- conv_1 + ReLU: k1 row-tap block-Toeplitz matmuls, lane-dense result ----
    y1 = jnp.zeros((rows_o, dc), f32)
    for ky in range(k1):
        lhs = f1_ref[:, ky:ky + ho, :].reshape(rows_o, win1 * cin1)
        y1 = y1 + jnp.dot(lhs, w1_ref[ky], preferred_element_type=f32)
    y1 = jnp.maximum(y1 + pk_ref[0:1, 0:dc], 0.0)

    # Row-padded copy for conv_3 / conv_4 (x padding lives inside the Toeplitz weights),
    # full-lane unmasked stores only.
    y1p_ref[:, 0:1, :] = jnp.zeros((n, 1, dc), f32)
    y1p_ref[:, ho + 1:ho + 2, :] = jnp.zeros((n, 1, dc), f32)
    y1p_ref[:, 1:ho + 1, :] = y1.reshape(n, ho, dc)

    # ---- upconv_2: all 4 sub-pixel phases fused into ONE accumulation over 3 row taps ----
    # columns ordered (ry, ox_low=v, rx, channel); bias b2 omitted (cancels in BatchNorm).
    y2 = jnp.zeros((rows_u, 2 * dc), f32)
    for ty in range(3):
        lhs = f2_ref[:, ty:ty + hin2, :].reshape(rows_u, win2 * cin2)
        y2 = y2 + jnp.dot(lhs, wup_ref[ty], preferred_element_type=f32)

    # ---- training-mode BatchNorm: two-pass (centered) batch statistics ----
    cnt = float(n * ho * wo)
    col_sum = jnp.sum(y2, axis=0, keepdims=True)                               # (1, 2dc)
    mean_c = jnp.dot(col_sum, pf_ref[...], preferred_element_type=f32) / cnt   # (1, c)
    mean_l = jnp.dot(mean_c, pb_ref[...], preferred_element_type=f32)          # (1, 2dc)
    cent = y2 - mean_l
    var_c = jnp.dot(jnp.sum(cent * cent, axis=0, keepdims=True), pf_ref[...],
                    preferred_element_type=f32) / cnt                          # (1, c)
    gamma = pk_ref[2:3, 0:c]
    beta = pk_ref[3:4, 0:c]
    scale_c = gamma * lax.rsqrt(var_c + BN_EPS)
    shift_c = beta - mean_c * scale_c
    scale_l = jnp.dot(scale_c, pb_ref[...], preferred_element_type=f32)        # (1, 2dc)
    shift_l = jnp.dot(shift_c, pb_ref[...], preferred_element_type=f32)
    y2n = y2 * scale_l + shift_l                                               # (rows_u, 2dc)

    # ---- interleave even/odd output rows (phase ry) into the dense row layout ----
    # TODO(synk): a stride-2 sublane store (output rows ry::2) or a direct
    # (rows_u, 2dc)->(rows_o, dc) value reshape would drop this scratch entirely;
    # the masked-sublane scratch path is kept because it is the proven lowering.
    for ry in range(2):
        y2asm_ref[:, :, ry, :] = y2n[:, ry * dc:(ry + 1) * dc].reshape(n, hin2, dc)
    y2d = y2asm_ref[...].reshape(rows_o, dc)

    # ---- conv_3 & conv_4: shared lhs, W3 || W4 fused along columns ----
    f34 = jnp.zeros((rows_o, 2 * dc), f32)
    for ky in range(3):
        lhs = y1p_ref[:, ky:ky + ho, :].reshape(rows_o, dc)
        f34 = f34 + jnp.dot(lhs, w34_ref[ky], preferred_element_type=f32)
    f34 = f34 + pk_ref[1:2, :]
    f3 = f34[:, 0:dc]                # vreg-aligned lane-block slices, no relayout
    f4 = f34[:, dc:2 * dc]

    # ---- out = LeakyReLU(0.2)(bn(upconv_2) * conv_4 + conv_3); full-lane store ----
    s = y2d * f4 + f3
    o_ref[...] = jnp.where(s >= 0.0, s, NEG_SLOPE * s).astype(o_ref.dtype)


# --------------------------------------------------------------------------
# Wrapper: one-time weight repacking (XLA / host side, negligible) + single pallas_call.
# --------------------------------------------------------------------------
def refinement_block_forward(f1, f2, params, cfg):
    n, hin1, win1, cin1 = f1.shape
    _, hin2, win2, cin2 = f2.shape
    k1, s1, p1 = cfg["kernel_size_1"], cfg["stride_1"], cfg["padding_1"]
    k2, s2, p2, op = (cfg["kernel_size_2"], cfg["up_stride_2"],
                      cfg["up_padding_2"], cfg["output_padding"])
    c = params["b1"].shape[0]

    # TODO(synk): only stride_1 == 1 and the (k=4, s=2, p=1, output_padding=0) sub-pixel
    # ConvTranspose configuration are implemented in the fused Pallas kernel.
    assert s1 == 1
    assert (k2, s2, p2, op) == (4, 2, 1, 0)

    ho = hin1 + 2 * p1 - k1 + 1
    wo = win1 + 2 * p1 - k1 + 1
    assert (ho, wo) == (s2 * hin2, s2 * win2)   # conv_1 / upconv_2 outputs must align
    dc = wo * c
    # NOTE: dc % 128 == 0 for this config keeps every store full-lane/unmasked; other
    # channel/width combinations are still correct but fall back to masked partial stores.

    f32 = jnp.float32
    # Row-only zero padding; x padding is folded into the block-Toeplitz weights below.
    f1rp = jnp.pad(f1.astype(f32).reshape(n, hin1, win1 * cin1),
                   ((0, 0), (p1, p1), (0, 0)))
    f2rp = jnp.pad(f2.astype(f32).reshape(n, hin2, win2 * cin2),
                   ((0, 0), (1, 1), (0, 0)))

    # ---------------- block-Toeplitz weight construction ----------------
    def conv_row_toeplitz(kw, w_in, w_out, pad):
        t = np.zeros((kw, w_in, w_out), np.float32)
        for kx in range(kw):
            for ox in range(w_out):
                x_in = ox + kx - pad
                if 0 <= x_in < w_in:
                    t[kx, x_in, ox] = 1.0
        return t

    # conv_1: per row-tap ky, (win1*cin1) -> (wo*c)
    t1 = conv_row_toeplitz(k1, win1, wo, p1)
    w1bt = jnp.einsum('kxo,ykic->yxioc', t1,
                      params["w1"]).reshape(k1, win1 * cin1, dc)

    # conv_3 || conv_4: per row-tap ky, (wo*c) -> (2*wo*c) with columns (sel, ox, ch)
    t34 = conv_row_toeplitz(3, wo, wo, 1)
    w34s = jnp.stack([params["w3"], params["w4"]], axis=0)           # (2,3,3,c,c)
    w34bt = jnp.einsum('kxo,sykic->yxisoc', t34, w34s).reshape(3, wo * c, 2 * dc)

    # upconv_2 (ConvTranspose k=4,s=2,p=1) fused over all 4 sub-pixel phases: per input
    # row-tap ty, (win2*cin2) -> (2*wo*c) with columns (ry, v, rx, ch); zeros where a phase
    # does not use that tap.
    sel = np.zeros((3, win2, 2, win2, 2, 4, 4), np.float32)
    for ty in range(3):
        for ry in range(2):
            a = ty - ry
            if a not in (0, 1):
                continue
            for rx in range(2):
                for b in (0, 1):
                    kh_i, kw_i = ry + 2 * a, rx + 2 * b
                    for v in range(win2):
                        x_in = v + rx + b - 1
                        if 0 <= x_in < win2:
                            sel[ty, x_in, ry, v, rx, kh_i, kw_i] = 1.0
    wupbt = jnp.einsum('txrvshw,hwic->txirvsc', sel,
                       params["w2"]).reshape(3, win2 * cin2, 2 * dc)

    # ---------------- packed small parameters (single input / DMA) ----------------
    # row 0: b1 lane-tiled | row 1: b3 || b4 lane-tiled | row 2: gamma | row 3: beta.
    # NOTE: b2 is dropped on purpose: a per-channel bias cancels exactly in training-mode BN.
    pk = jnp.zeros((4, 2 * dc), f32)
    pk = pk.at[0, :dc].set(jnp.tile(params["b1"], wo))
    pk = pk.at[1, :dc].set(jnp.tile(params["b3"], wo))
    pk = pk.at[1, dc:].set(jnp.tile(params["b4"], wo))
    pk = pk.at[2, :c].set(params["gamma"])
    pk = pk.at[3, :c].set(params["beta"])

    # Per-channel fold / broadcast 0-1 matrices for BN statistics (lane channel = col % c).
    fold = (np.arange(2 * dc)[:, None] % c == np.arange(c)[None, :]).astype(np.float32)
    p_fold = jnp.asarray(fold)            # (2*dc, c)
    p_bcast = jnp.asarray(fold.T)         # (c, 2*dc)

    kernel = functools.partial(
        _fused_kernel, n=n, k1=k1, ho=ho, wo=wo, c=c,
        hin2=hin2, win2=win2, cin2=cin2, win1=win1, cin1=cin1)

    out2d = pl.pallas_call(
        kernel,
        out_shape=jax.ShapeDtypeStruct((n * ho, dc), jnp.float32),   # lane-dense (32, 128)
        grid=(1,),
        in_specs=[
            pl.BlockSpec((n, hin1 + 2 * p1, win1 * cin1), lambda i: (0, 0, 0)),
            pl.BlockSpec((n, hin2 + 2, win2 * cin2), lambda i: (0, 0, 0)),
            pl.BlockSpec((k1, win1 * cin1, dc), lambda i: (0, 0, 0)),
            pl.BlockSpec((3, win2 * cin2, 2 * dc), lambda i: (0, 0, 0)),
            pl.BlockSpec((3, wo * c, 2 * dc), lambda i: (0, 0, 0)),
            pl.BlockSpec((4, 2 * dc), lambda i: (0, 0)),
            pl.BlockSpec((2 * dc, c), lambda i: (0, 0)),
            pl.BlockSpec((c, 2 * dc), lambda i: (0, 0)),
        ],
        out_specs=pl.BlockSpec((n * ho, dc), lambda i: (0, 0)),
        scratch_shapes=[
            pltpu.VMEM((n, ho + 2, dc), jnp.float32),        # row-padded y1 (lane-dense)
            pltpu.VMEM((n, hin2, 2, dc), jnp.float32),       # upconv phase-interleave
        ],
        compiler_params=pltpu.CompilerParams(
            dimension_semantics=("arbitrary",),
            vmem_limit_bytes=32 * 1024 * 1024,
        ),
    )(f1rp, f2rp, w1bt, wupbt, w34bt, pk, p_fold, p_bcast)

    return out2d.reshape(n, ho, wo, c)


# --------------------------------------------------------------------------
# Pure-JAX reference (same math, lax convolutions) for the correctness check.
# --------------------------------------------------------------------------
def reference_forward(f1, f2, params, cfg):
    dn = ("NHWC", "HWIO", "NHWC")
    p1 = cfg["padding_1"]
    k2, s2, p2, op = (cfg["kernel_size_2"], cfg["up_stride_2"],
                      cfg["up_padding_2"], cfg["output_padding"])
    y1 = lax.conv_general_dilated(f1, params["w1"], (1, 1), [(p1, p1)] * 2,
                                  dimension_numbers=dn) + params["b1"]
    y1 = jnp.maximum(y1, 0.0)
    pt = k2 - 1 - p2
    y2 = lax.conv_general_dilated(f2, params["w2"], (1, 1), [(pt, pt + op)] * 2,
                                  lhs_dilation=(s2, s2), dimension_numbers=dn) + params["b2"]
    mean = y2.mean(axis=(0, 1, 2))
    var = y2.var(axis=(0, 1, 2))
    y2n = (y2 - mean) / jnp.sqrt(var + BN_EPS) * params["gamma"] + params["beta"]
    y3 = lax.conv_general_dilated(y1, params["w3"], (1, 1), [(1, 1)] * 2,
                                  dimension_numbers=dn) + params["b3"]
    y4 = lax.conv_general_dilated(y1, params["w4"], (1, 1), [(1, 1)] * 2,
                                  dimension_numbers=dn) + params["b4"]
    s = y2n * y4 + y3
    return jnp.where(s >= 0, s, NEG_SLOPE * s)


# --------------------------------------------------------------------------
if __name__ == "__main__":
    # RefinementBlock(in_channels_1=4, in_channels_2=6, out_channels=8,
    #                 kernel_size_1=3, kernel_size_2=4, stride_1=1, up_stride_2=2,
    #                 padding_1=1, up_padding_2=1, output_padding=0)
    cfg = dict(kernel_size_1=3, kernel_size_2=4, stride_1=1, up_stride_2=2,
               padding_1=1, up_padding_2=1, output_padding=0)
    N, Cin1, Cin2, Cout = 2, 4, 6, 8
    H1 = W1 = 16          # f_1 spatial
    H2 = W2 = 8           # f_2 spatial (upsampled x2 -> 16x16)

    keys = jax.random.split(jax.random.PRNGKey(0), 10)
    # inputs (NHWC; NCHW equivalents are [2,4,16,16] and [2,6,8,8])
    f1 = jax.random.normal(keys[0], (N, H1, W1, Cin1), jnp.float32)
    f2 = jax.random.normal(keys[1], (N, H2, W2, Cin2), jnp.float32)

    # deterministic parameter init (PyTorch layouts, converted to HWIO)
    w1_oihw = 0.1 * jax.random.normal(keys[2], (Cout, Cin1, 3, 3), jnp.float32)
    b1 = 0.05 * jax.random.normal(keys[3], (Cout,), jnp.float32)
    w2_t = 0.1 * jax.random.normal(keys[4], (Cin2, Cout, 4, 4), jnp.float32)  # ConvTranspose2d (in,out,kh,kw)
    b2 = 0.05 * jax.random.normal(keys[5], (Cout,), jnp.float32)
    w3_oihw = 0.1 * jax.random.normal(keys[6], (Cout, Cout, 3, 3), jnp.float32)
    b3 = 0.05 * jax.random.normal(keys[7], (Cout,), jnp.float32)
    w4_oihw = 0.1 * jax.random.normal(keys[8], (Cout, Cout, 3, 3), jnp.float32)
    b4 = 0.05 * jax.random.normal(keys[9], (Cout,), jnp.float32)

    params = dict(
        w1=jnp.transpose(w1_oihw, (2, 3, 1, 0)), b1=b1,
        # ConvTranspose2d -> equivalent stride-1 conv kernel: flip spatially, swap in/out
        w2=jnp.transpose(jnp.flip(w2_t, axis=(2, 3)), (2, 3, 0, 1)), b2=b2,
        w3=jnp.transpose(w3_oihw, (2, 3, 1, 0)), b3=b3,
        w4=jnp.transpose(w4_oihw, (2, 3, 1, 0)), b4=b4,
        gamma=jnp.ones((Cout,), jnp.float32),   # BatchNorm2d default init
        beta=jnp.zeros((Cout,), jnp.float32),
    )

    out = refinement_block_forward(f1, f2, params, cfg)
    out = jax.block_until_ready(out)

    ref = reference_forward(f1, f2, params, cfg)
    assert out.shape == (N, H1, W1, Cout), out.shape
    assert jnp.max(jnp.abs(out - ref)) < 1e-3, float(jnp.max(jnp.abs(out - ref)))
    print("KERNEL_OK")
</pallas_src>

<mosaic_0001>
module attributes {stable_mosaic.version = 11 : i64} {
  func.func @_fused_kernel(%arg0: i32, %arg1: memref<2x18x64xf32, #tpu.memory_space<vmem>>, %arg2: memref<2x10x48xf32, #tpu.memory_space<vmem>>, %arg3: memref<3x64x128xf32, #tpu.memory_space<vmem>>, %arg4: memref<3x48x256xf32, #tpu.memory_space<vmem>>, %arg5: memref<3x128x256xf32, #tpu.memory_space<vmem>>, %arg6: memref<4x256xf32, #tpu.memory_space<vmem>>, %arg7: memref<256x8xf32, #tpu.memory_space<vmem>>, %arg8: memref<8x256xf32, #tpu.memory_space<vmem>>, %arg9: memref<32x128xf32, #tpu.memory_space<vmem>>, %arg10: memref<2x18x128xf32, #tpu.memory_space<vmem>>, %arg11: memref<2x8x2x128xf32, #tpu.memory_space<vmem>>) attributes {dimension_semantics = [#tpu.dimension_semantics<arbitrary>], iteration_bounds = array<i64: 1>, scalar_prefetch = 0 : i64, scratch_operands = 2 : i64, tpu.core_type = #tpu.core_type<tc>, window_params = [{pipeline_mode = #tpu.pipeline_mode<synchronous>, transform_indices = @transform_0, window_bounds = array<i64: 2, 18, 64>}, {pipeline_mode = #tpu.pipeline_mode<synchronous>, transform_indices = @transform_1, window_bounds = array<i64: 2, 10, 48>}, {pipeline_mode = #tpu.pipeline_mode<synchronous>, transform_indices = @transform_2, window_bounds = array<i64: 3, 64, 128>}, {pipeline_mode = #tpu.pipeline_mode<synchronous>, transform_indices = @transform_3, window_bounds = array<i64: 3, 48, 256>}, {pipeline_mode = #tpu.pipeline_mode<synchronous>, transform_indices = @transform_4, window_bounds = array<i64: 3, 128, 256>}, {pipeline_mode = #tpu.pipeline_mode<synchronous>, transform_indices = @transform_5, window_bounds = array<i64: 4, 256>}, {pipeline_mode = #tpu.pipeline_mode<synchronous>, transform_indices = @transform_6, window_bounds = array<i64: 256, 8>}, {pipeline_mode = #tpu.pipeline_mode<synchronous>, transform_indices = @transform_7, window_bounds = array<i64: 8, 256>}, {pipeline_mode = #tpu.pipeline_mode<synchronous>, transform_indices = @transform_8, window_bounds = array<i64: 32, 128>}]} {
    %cst = arith.constant 0.000000e+00 : f32
    %0 = vector.broadcast %cst : f32 to vector<32x128xf32>
    %c0 = arith.constant 0 : index
    %c0_0 = arith.constant 0 : index
    %c0_1 = arith.constant 0 : index
    %1 = vector.load %arg1[%c0, %c0_0, %c0_1] : memref<2x18x64xf32, #tpu.memory_space<vmem>>, vector<2x16x64xf32>
    %2 = vector.shape_cast %1 : vector<2x16x64xf32> to vector<32x64xf32>
    %c0_2 = arith.constant 0 : index
    %c0_3 = arith.constant 0 : index
    %c0_4 = arith.constant 0 : index
    %3 = vector.load %arg3[%c0_2, %c0_3, %c0_4] : memref<3x64x128xf32, #tpu.memory_space<vmem>>, vector<1x64x128xf32>
    %4 = vector.shape_cast %3 : vector<1x64x128xf32> to vector<64x128xf32>
    %cst_5 = arith.constant dense<0.000000e+00> : vector<32x128xf32>
    %5 = tpu.matmul %2, %4, %cst_5 {dimension_numbers = #tpu.dot_dimension_numbers<[1], [0], [0], [1], [0, 0, 1, 1], [], []>} : vector<32x64xf32>, vector<64x128xf32>, vector<32x128xf32> -> vector<32x128xf32>
    %6 = arith.addf %0, %5 : vector<32x128xf32>
    %c0_6 = arith.constant 0 : index
    %c1 = arith.constant 1 : index
    %c0_7 = arith.constant 0 : index
    %7 = vector.load %arg1[%c0_6, %c1, %c0_7] : memref<2x18x64xf32, #tpu.memory_space<vmem>>, vector<2x16x64xf32>
    %8 = vector.shape_cast %7 : vector<2x16x64xf32> to vector<32x64xf32>
    %c1_8 = arith.constant 1 : index
    %c0_9 = arith.constant 0 : index
    %c0_10 = arith.constant 0 : index
    %9 = vector.load %arg3[%c1_8, %c0_9, %c0_10] : memref<3x64x128xf32, #tpu.memory_space<vmem>>, vector<1x64x128xf32>
    %10 = vector.shape_cast %9 : vector<1x64x128xf32> to vector<64x128xf32>
    %cst_11 = arith.constant dense<0.000000e+00> : vector<32x128xf32>
    %11 = tpu.matmul %8, %10, %cst_11 {dimension_numbers = #tpu.dot_dimension_numbers<[1], [0], [0], [1], [0, 0, 1, 1], [], []>} : vector<32x64xf32>, vector<64x128xf32>, vector<32x128xf32> -> vector<32x128xf32>
    %12 = arith.addf %6, %11 : vector<32x128xf32>
    %c0_12 = arith.constant 0 : index
    %c2 = arith.constant 2 : index
    %c0_13 = arith.constant 0 : index
    %13 = vector.load %arg1[%c0_12, %c2, %c0_13] : memref<2x18x64xf32, #tpu.memory_space<vmem>>, vector<2x16x64xf32>
    %14 = vector.shape_cast %13 : vector<2x16x64xf32> to vector<32x64xf32>
    %c2_14 = arith.constant 2 : index
    %c0_15 = arith.constant 0 : index
    %c0_16 = arith.constant 0 : index
    %15 = vector.load %arg3[%c2_14, %c0_15, %c0_16] : memref<3x64x128xf32, #tpu.memory_space<vmem>>, vector<1x64x128xf32>
    %16 = vector.shape_cast %15 : vector<1x64x128xf32> to vector<64x128xf32>
    %cst_17 = arith.constant dense<0.000000e+00> : vector<32x128xf32>
    %17 = tpu.matmul %14, %16, %cst_17 {dimension_numbers = #tpu.dot_dimension_numbers<[1], [0], [0], [1], [0, 0, 1, 1], [], []>} : vector<32x64xf32>, vector<64x128xf32>, vector<32x128xf32> -> vector<32x128xf32>
    %18 = arith.addf %12, %17 : vector<32x128xf32>
    %c0_18 = arith.constant 0 : index
    %c0_19 = arith.constant 0 : index
    %19 = vector.load %arg6[%c0_18, %c0_19] : memref<4x256xf32, #tpu.memory_space<vmem>>, vector<1x128xf32>
    %20 = vector.broadcast %19 : vector<1x128xf32> to vector<32x128xf32>
    %21 = arith.addf %18, %20 : vector<32x128xf32>
    %cst_20 = arith.constant 0.000000e+00 : f32
    %22 = vector.broadcast %cst_20 : f32 to vector<32x128xf32>
    %23 = arith.maximumf %21, %22 : vector<32x128xf32>
    %cst_21 = arith.constant 0.000000e+00 : f32
    %24 = vector.broadcast %cst_21 : f32 to vector<2x1x128xf32>
    %c0_22 = arith.constant 0 : index
    %c0_23 = arith.constant 0 : index
    %c0_24 = arith.constant 0 : index
    %25 = vector.load %arg10[%c0_22, %c0_23, %c0_24] : memref<2x18x128xf32, #tpu.memory_space<vmem>>, vector<2x1x128xf32>
    tpu.vector_store %arg10[%c0_22, %c0_23, %c0_24], %24 {strides = array<i32>} : memref<2x18x128xf32, #tpu.memory_space<vmem>>, vector<2x1x128xf32>,
    %cst_25 = arith.constant 0.000000e+00 : f32
    %26 = vector.broadcast %cst_25 : f32 to vector<2x1x128xf32>
    %c0_26 = arith.constant 0 : index
    %c17 = arith.constant 17 : index
    %c0_27 = arith.constant 0 : index
    %27 = vector.load %arg10[%c0_26, %c17, %c0_27] : memref<2x18x128xf32, #tpu.memory_space<vmem>>, vector<2x1x128xf32>
    tpu.vector_store %arg10[%c0_26, %c17, %c0_27], %26 {strides = array<i32>} : memref<2x18x128xf32, #tpu.memory_space<vmem>>, vector<2x1x128xf32>,
    %28 = vector.shape_cast %23 : vector<32x128xf32> to vector<2x16x128xf32>
    %c0_28 = arith.constant 0 : index
    %c1_29 = arith.constant 1 : index
    %c0_30 = arith.constant 0 : index
    %29 = vector.load %arg10[%c0_28, %c1_29, %c0_30] : memref<2x18x128xf32, #tpu.memory_space<vmem>>, vector<2x16x128xf32>
    tpu.vector_store %arg10[%c0_28, %c1_29, %c0_30], %28 {strides = array<i32>} : memref<2x18x128xf32, #tpu.memory_space<vmem>>, vector<2x16x128xf32>,
    %cst_31 = arith.constant 0.000000e+00 : f32
    %30 = vector.broadcast %cst_31 : f32 to vector<16x256xf32>
    %c0_32 = arith.constant 0 : index
    %c0_33 = arith.constant 0 : index
    %c0_34 = arith.constant 0 : index
    %31 = vector.load %arg2[%c0_32, %c0_33, %c0_34] : memref<2x10x48xf32, #tpu.memory_space<vmem>>, vector<2x8x48xf32>
    %32 = vector.shape_cast %31 : vector<2x8x48xf32> to vector<16x48xf32>
    %c0_35 = arith.constant 0 : index
    %c0_36 = arith.constant 0 : index
    %c0_37 = arith.constant 0 : index
    %33 = vector.load %arg4[%c0_35, %c0_36, %c0_37] : memref<3x48x256xf32, #tpu.memory_space<vmem>>, vector<1x48x256xf32>
    %34 = vector.shape_cast %33 : vector<1x48x256xf32> to vector<48x256xf32>
    %cst_38 = arith.constant dense<0.000000e+00> : vector<16x256xf32>
    %35 = tpu.matmul %32, %34, %cst_38 {dimension_numbers = #tpu.dot_dimension_numbers<[1], [0], [0], [1], [0, 0, 1, 1], [], []>} : vector<16x48xf32>, vector<48x256xf32>, vector<16x256xf32> -> vector<16x256xf32>
    %36 = arith.addf %30, %35 : vector<16x256xf32>
    %c0_39 = arith.constant 0 : index
    %c1_40 = arith.constant 1 : index
    %c0_41 = arith.constant 0 : index
    %37 = vector.load %arg2[%c0_39, %c1_40, %c0_41] : memref<2x10x48xf32, #tpu.memory_space<vmem>>, vector<2x8x48xf32>
    %38 = vector.shape_cast %37 : vector<2x8x48xf32> to vector<16x48xf32>
    %c1_42 = arith.constant 1 : index
    %c0_43 = arith.constant 0 : index
    %c0_44 = arith.constant 0 : index
    %39 = vector.load %arg4[%c1_42, %c0_43, %c0_44] : memref<3x48x256xf32, #tpu.memory_space<vmem>>, vector<1x48x256xf32>
    %40 = vector.shape_cast %39 : vector<1x48x256xf32> to vector<48x256xf32>
    %cst_45 = arith.constant dense<0.000000e+00> : vector<16x256xf32>
    %41 = tpu.matmul %38, %40, %cst_45 {dimension_numbers = #tpu.dot_dimension_numbers<[1], [0], [0], [1], [0, 0, 1, 1], [], []>} : vector<16x48xf32>, vector<48x256xf32>, vector<16x256xf32> -> vector<16x256xf32>
    %42 = arith.addf %36, %41 : vector<16x256xf32>
    %c0_46 = arith.constant 0 : index
    %c2_47 = arith.constant 2 : index
    %c0_48 = arith.constant 0 : index
    %43 = vector.load %arg2[%c0_46, %c2_47, %c0_48] : memref<2x10x48xf32, #tpu.memory_space<vmem>>, vector<2x8x48xf32>
    %44 = vector.shape_cast %43 : vector<2x8x48xf32> to vector<16x48xf32>
    %c2_49 = arith.constant 2 : index
    %c0_50 = arith.constant 0 : index
    %c0_51 = arith.constant 0 : index
    %45 = vector.load %arg4[%c2_49, %c0_50, %c0_51] : memref<3x48x256xf32, #tpu.memory_space<vmem>>, vector<1x48x256xf32>
    %46 = vector.shape_cast %45 : vector<1x48x256xf32> to vector<48x256xf32>
    %cst_52 = arith.constant dense<0.000000e+00> : vector<16x256xf32>
    %47 = tpu.matmul %44, %46, %cst_52 {dimension_numbers = #tpu.dot_dimension_numbers<[1], [0], [0], [1], [0, 0, 1, 1], [], []>} : vector<16x48xf32>, vector<48x256xf32>, vector<16x256xf32> -> vector<16x256xf32>
    %48 = arith.addf %42, %47 : vector<16x256xf32>
    %cst_53 = arith.constant dense<0.000000e+00> : vector<256xf32>
    %49 = vector.multi_reduction <add>, %48, %cst_53 [0] : vector<16x256xf32> to vector<256xf32>
    %50 = vector.shape_cast %49 : vector<256xf32> to vector<1x256xf32>
    %c0_54 = arith.constant 0 : index
    %c0_55 = arith.constant 0 : index
    %51 = vector.load %arg7[%c0_54, %c0_55] : memref<256x8xf32, #tpu.memory_space<vmem>>, vector<256x8xf32>
    %cst_56 = arith.constant dense<0.000000e+00> : vector<1x8xf32>
    %52 = tpu.matmul %50, %51, %cst_56 {dimension_numbers = #tpu.dot_dimension_numbers<[1], [0], [0], [1], [0, 0, 1, 1], [], []>} : vector<1x256xf32>, vector<256x8xf32>, vector<1x8xf32> -> vector<1x8xf32>
    %cst_57 = arith.constant 5.120000e+02 : f32
    %53 = vector.broadcast %cst_57 : f32 to vector<1x8xf32>
    %54 = arith.divf %52, %53 : vector<1x8xf32>
    %c0_58 = arith.constant 0 : index
    %c0_59 = arith.constant 0 : index
    %55 = vector.load %arg8[%c0_58, %c0_59] : memref<8x256xf32, #tpu.memory_space<vmem>>, vector<8x256xf32>
    %cst_60 = arith.constant dense<0.000000e+00> : vector<1x256xf32>
    %56 = tpu.matmul %54, %55, %cst_60 {dimension_numbers = #tpu.dot_dimension_numbers<[1], [0], [0], [1], [0, 0, 1, 1], [], []>} : vector<1x8xf32>, vector<8x256xf32>, vector<1x256xf32> -> vector<1x256xf32>
    %57 = vector.broadcast %56 : vector<1x256xf32> to vector<16x256xf32>
    %58 = arith.subf %48, %57 : vector<16x256xf32>
    %59 = arith.mulf %58, %58 : vector<16x256xf32>
    %cst_61 = arith.constant dense<0.000000e+00> : vector<256xf32>
    %60 = vector.multi_reduction <add>, %59, %cst_61 [0] : vector<16x256xf32> to vector<256xf32>
    %61 = vector.shape_cast %60 : vector<256xf32> to vector<1x256xf32>
    %c0_62 = arith.constant 0 : index
    %c0_63 = arith.constant 0 : index
    %62 = vector.load %arg7[%c0_62, %c0_63] : memref<256x8xf32, #tpu.memory_space<vmem>>, vector<256x8xf32>
    %cst_64 = arith.constant dense<0.000000e+00> : vector<1x8xf32>
    %63 = tpu.matmul %61, %62, %cst_64 {dimension_numbers = #tpu.dot_dimension_numbers<[1], [0], [0], [1], [0, 0, 1, 1], [], []>} : vector<1x256xf32>, vector<256x8xf32>, vector<1x8xf32> -> vector<1x8xf32>
    %cst_65 = arith.constant 5.120000e+02 : f32
    %64 = vector.broadcast %cst_65 : f32 to vector<1x8xf32>
    %65 = arith.divf %63, %64 : vector<1x8xf32>
    %c2_66 = arith.constant 2 : index
    %c0_67 = arith.constant 0 : index
    %66 = vector.load %arg6[%c2_66, %c0_67] : memref<4x256xf32, #tpu.memory_space<vmem>>, vector<1x8xf32>
    %c3 = arith.constant 3 : index
    %c0_68 = arith.constant 0 : index
    %67 = vector.load %arg6[%c3, %c0_68] : memref<4x256xf32, #tpu.memory_space<vmem>>, vector<1x8xf32>
    %cst_69 = arith.constant 9.99999974E-6 : f32
    %68 = vector.broadcast %cst_69 : f32 to vector<1x8xf32>
    %69 = arith.addf %65, %68 : vector<1x8xf32>
    %70 = math.rsqrt %69 : vector<1x8xf32>
    %71 = arith.mulf %66, %70 : vector<1x8xf32>
    %72 = arith.mulf %54, %71 : vector<1x8xf32>
    %73 = arith.subf %67, %72 : vector<1x8xf32>
    %c0_70 = arith.constant 0 : index
    %c0_71 = arith.constant 0 : index
    %74 = vector.load %arg8[%c0_70, %c0_71] : memref<8x256xf32, #tpu.memory_space<vmem>>, vector<8x256xf32>
    %cst_72 = arith.constant dense<0.000000e+00> : vector<1x256xf32>
    %75 = tpu.matmul %71, %74, %cst_72 {dimension_numbers = #tpu.dot_dimension_numbers<[1], [0], [0], [1], [0, 0, 1, 1], [], []>} : vector<1x8xf32>, vector<8x256xf32>, vector<1x256xf32> -> vector<1x256xf32>
    %c0_73 = arith.constant 0 : index
    %c0_74 = arith.constant 0 : index
    %76 = vector.load %arg8[%c0_73, %c0_74] : memref<8x256xf32, #tpu.memory_space<vmem>>, vector<8x256xf32>
    %cst_75 = arith.constant dense<0.000000e+00> : vector<1x256xf32>
    %77 = tpu.matmul %73, %76, %cst_75 {dimension_numbers = #tpu.dot_dimension_numbers<[1], [0], [0], [1], [0, 0, 1, 1], [], []>} : vector<1x8xf32>, vector<8x256xf32>, vector<1x256xf32> -> vector<1x256xf32>
    %78 = vector.broadcast %75 : vector<1x256xf32> to vector<16x256xf32>
    %79 = arith.mulf %48, %78 : vector<16x256xf32>
    %80 = vector.broadcast %77 : vector<1x256xf32> to vector<16x256xf32>
    %81 = arith.addf %79, %80 : vector<16x256xf32>
    %82 = vector.extract_strided_slice %81 {offsets = [0, 0], sizes = [16, 128], strides = [1, 1]} : vector<16x256xf32> to vector<16x128xf32>
    %83 = vector.shape_cast %82 : vector<16x128xf32> to vector<2x8x128xf32>
    %c0_76 = arith.constant 0 : index
    %c0_77 = arith.constant 0 : index
    %c0_78 = arith.constant 0 : index
    %c0_79 = arith.constant 0 : index
    %84 = vector.load %arg11[%c0_76, %c0_77, %c0_78, %c0_79] : memref<2x8x2x128xf32, #tpu.memory_space<vmem>>, vector<2x8x1x128xf32>
    %85 = vector.shape_cast %84 : vector<2x8x1x128xf32> to vector<2x8x128xf32>
    %86 = vector.shape_cast %83 : vector<2x8x128xf32> to vector<2x8x1x128xf32>
    tpu.vector_store %arg11[%c0_76, %c0_77, %c0_78, %c0_79], %86 {strides = array<i32>} : memref<2x8x2x128xf32, #tpu.memory_space<vmem>>, vector<2x8x1x128xf32>,
    %87 = vector.extract_strided_slice %81 {offsets = [0, 128], sizes = [16, 128], strides = [1, 1]} : vector<16x256xf32> to vector<16x128xf32>
    %88 = vector.shape_cast %87 : vector<16x128xf32> to vector<2x8x128xf32>
    %c0_80 = arith.constant 0 : index
    %c0_81 = arith.constant 0 : index
    %c1_82 = arith.constant 1 : index
    %c0_83 = arith.constant 0 : index
    %89 = vector.load %arg11[%c0_80, %c0_81, %c1_82, %c0_83] : memref<2x8x2x128xf32, #tpu.memory_space<vmem>>, vector<2x8x1x128xf32>
    %90 = vector.shape_cast %89 : vector<2x8x1x128xf32> to vector<2x8x128xf32>
    %91 = vector.shape_cast %88 : vector<2x8x128xf32> to vector<2x8x1x128xf32>
    tpu.vector_store %arg11[%c0_80, %c0_81, %c1_82, %c0_83], %91 {strides = array<i32>} : memref<2x8x2x128xf32, #tpu.memory_space<vmem>>, vector<2x8x1x128xf32>,
    %c0_84 = arith.constant 0 : index
    %c0_85 = arith.constant 0 : index
    %c0_86 = arith.constant 0 : index
    %c0_87 = arith.constant 0 : index
    %92 = vector.load %arg11[%c0_84, %c0_85, %c0_86, %c0_87] : memref<2x8x2x128xf32, #tpu.memory_space<vmem>>, vector<2x8x2x128xf32>
    %93 = vector.shape_cast %92 : vector<2x8x2x128xf32> to vector<32x128xf32>
    %cst_88 = arith.constant 0.000000e+00 : f32
    %94 = vector.broadcast %cst_88 : f32 to vector<32x256xf32>
    %c0_89 = arith.constant 0 : index
    %c0_90 = arith.constant 0 : index
    %c0_91 = arith.constant 0 : index
    %95 = vector.load %arg10[%c0_89, %c0_90, %c0_91] : memref<2x18x128xf32, #tpu.memory_space<vmem>>, vector<2x16x128xf32>
    %96 = vector.shape_cast %95 : vector<2x16x128xf32> to vector<32x128xf32>
    %c0_92 = arith.constant 0 : index
    %c0_93 = arith.constant 0 : index
    %c0_94 = arith.constant 0 : index
    %97 = vector.load %arg5[%c0_92, %c0_93, %c0_94] : memref<3x128x256xf32, #tpu.memory_space<vmem>>, vector<1x128x256xf32>
    %98 = vector.shape_cast %97 : vector<1x128x256xf32> to vector<128x256xf32>
    %cst_95 = arith.constant dense<0.000000e+00> : vector<32x256xf32>
    %99 = tpu.matmul %96, %98, %cst_95 {dimension_numbers = #tpu.dot_dimension_numbers<[1], [0], [0], [1], [0, 0, 1, 1], [], []>} : vector<32x128xf32>, vector<128x256xf32>, vector<32x256xf32> -> vector<32x256xf32>
    %100 = arith.addf %94, %99 : vector<32x256xf32>
    %c0_96 = arith.constant 0 : index
    %c1_97 = arith.constant 1 : index
    %c0_98 = arith.constant 0 : index
    %101 = vector.load %arg10[%c0_96, %c1_97, %c0_98] : memref<2x18x128xf32, #tpu.memory_space<vmem>>, vector<2x16x128xf32>
    %102 = vector.shape_cast %101 : vector<2x16x128xf32> to vector<32x128xf32>
    %c1_99 = arith.constant 1 : index
    %c0_100 = arith.constant 0 : index
    %c0_101 = arith.constant 0 : index
    %103 = vector.load %arg5[%c1_99, %c0_100, %c0_101] : memref<3x128x256xf32, #tpu.memory_space<vmem>>, vector<1x128x256xf32>
    %104 = vector.shape_cast %103 : vector<1x128x256xf32> to vector<128x256xf32>
    %cst_102 = arith.constant dense<0.000000e+00> : vector<32x256xf32>
    %105 = tpu.matmul %102, %104, %cst_102 {dimension_numbers = #tpu.dot_dimension_numbers<[1], [0], [0], [1], [0, 0, 1, 1], [], []>} : vector<32x128xf32>, vector<128x256xf32>, vector<32x256xf32> -> vector<32x256xf32>
    %106 = arith.addf %100, %105 : vector<32x256xf32>
    %c0_103 = arith.constant 0 : index
    %c2_104 = arith.constant 2 : index
    %c0_105 = arith.constant 0 : index
    %107 = vector.load %arg10[%c0_103, %c2_104, %c0_105] : memref<2x18x128xf32, #tpu.memory_space<vmem>>, vector<2x16x128xf32>
    %108 = vector.shape_cast %107 : vector<2x16x128xf32> to vector<32x128xf32>
    %c2_106 = arith.constant 2 : index
    %c0_107 = arith.constant 0 : index
    %c0_108 = arith.constant 0 : index
    %109 = vector.load %arg5[%c2_106, %c0_107, %c0_108] : memref<3x128x256xf32, #tpu.memory_space<vmem>>, vector<1x128x256xf32>
    %110 = vector.shape_cast %109 : vector<1x128x256xf32> to vector<128x256xf32>
    %cst_109 = arith.constant dense<0.000000e+00> : vector<32x256xf32>
    %111 = tpu.matmul %108, %110, %cst_109 {dimension_numbers = #tpu.dot_dimension_numbers<[1], [0], [0], [1], [0, 0, 1, 1], [], []>} : vector<32x128xf32>, vector<128x256xf32>, vector<32x256xf32> -> vector<32x256xf32>
    %112 = arith.addf %106, %111 : vector<32x256xf32>
    %c1_110 = arith.constant 1 : index
    %c0_111 = arith.constant 0 : index
    %113 = vector.load %arg6[%c1_110, %c0_111] : memref<4x256xf32, #tpu.memory_space<vmem>>, vector<1x256xf32>
    %114 = vector.broadcast %113 : vector<1x256xf32> to vector<32x256xf32>
    %115 = arith.addf %112, %114 : vector<32x256xf32>
    %116 = vector.extract_strided_slice %115 {offsets = [0, 0], sizes = [32, 128], strides = [1, 1]} : vector<32x256xf32> to vector<32x128xf32>
    %117 = vector.extract_strided_slice %115 {offsets = [0, 128], sizes = [32, 128], strides = [1, 1]} : vector<32x256xf32> to vector<32x128xf32>
    %118 = arith.mulf %93, %117 : vector<32x128xf32>
    %119 = arith.addf %118, %116 : vector<32x128xf32>
    %cst_112 = arith.constant 0.000000e+00 : f32
    %120 = vector.broadcast %cst_112 : f32 to vector<32x128xf32>
    %121 = arith.cmpf oge, %119, %120 : vector<32x128xf32>
    %cst_113 = arith.constant 2.000000e-01 : f32
    %122 = vector.broadcast %cst_113 : f32 to vector<32x128xf32>
    %123 = arith.mulf %122, %119 : vector<32x128xf32>
    %124 = arith.select %121, %119, %123 : vector<32x128xi1>, vector<32x128xf32>
    %c0_114 = arith.constant 0 : index
    %c0_115 = arith.constant 0 : index
    %125 = vector.load %arg9[%c0_114, %c0_115] : memref<32x128xf32, #tpu.memory_space<vmem>>, vector<32x128xf32>
    tpu.vector_store %arg9[%c0_114, %c0_115], %124 {strides = array<i32>} : memref<32x128xf32, #tpu.memory_space<vmem>>, vector<32x128xf32>,
    return
  }
  func.func @transform_0(%arg0: i32) -> (i32, i32, i32) {
    %c0_i32 = arith.constant 0 : i32
    %c0_i32_0 = arith.constant 0 : i32
    %c0_i32_1 = arith.constant 0 : i32
    %c0_i32_2 = arith.constant 0 : i32
    return %c0_i32, %c0_i32_0, %c0_i32_1 : i32, i32, i32
  }
  func.func @transform_1(%arg0: i32) -> (i32, i32, i32) {
    %c0_i32 = arith.constant 0 : i32
    %c0_i32_0 = arith.constant 0 : i32
    %c0_i32_1 = arith.constant 0 : i32
    %c0_i32_2 = arith.constant 0 : i32
    return %c0_i32, %c0_i32_0, %c0_i32_1 : i32, i32, i32
  }
  func.func @transform_2(%arg0: i32) -> (i32, i32, i32) {
    %c0_i32 = arith.constant 0 : i32
    %c0_i32_0 = arith.constant 0 : i32
    %c0_i32_1 = arith.constant 0 : i32
    %c0_i32_2 = arith.constant 0 : i32
    return %c0_i32, %c0_i32_0, %c0_i32_1 : i32, i32, i32
  }
  func.func @transform_3(%arg0: i32) -> (i32, i32, i32) {
    %c0_i32 = arith.constant 0 : i32
    %c0_i32_0 = arith.constant 0 : i32
    %c0_i32_1 = arith.constant 0 : i32
    %c0_i32_2 = arith.constant 0 : i32
    return %c0_i32, %c0_i32_0, %c0_i32_1 : i32, i32, i32
  }
  func.func @transform_4(%arg0: i32) -> (i32, i32, i32) {
    %c0_i32 = arith.constant 0 : i32
    %c0_i32_0 = arith.constant 0 : i32
    %c0_i32_1 = arith.constant 0 : i32
    %c0_i32_2 = arith.constant 0 : i32
    return %c0_i32, %c0_i32_0, %c0_i32_1 : i32, i32, i32
  }
  func.func @transform_5(%arg0: i32) -> (i32, i32) {
    %c0_i32 = arith.constant 0 : i32
    %c0_i32_0 = arith.constant 0 : i32
    %c0_i32_1 = arith.constant 0 : i32
    return %c0_i32, %c0_i32_0 : i32, i32
  }
  func.func @transform_6(%arg0: i32) -> (i32, i32) {
    %c0_i32 = arith.constant 0 : i32
    %c0_i32_0 = arith.constant 0 : i32
    %c0_i32_1 = arith.constant 0 : i32
    return %c0_i32, %c0_i32_0 : i32, i32
  }
  func.func @transform_7(%arg0: i32) -> (i32, i32) {
    %c0_i32 = arith.constant 0 : i32
    %c0_i32_0 = arith.constant 0 : i32
    %c0_i32_1 = arith.constant 0 : i32
    return %c0_i32, %c0_i32_0 : i32, i32
  }
  func.func @transform_8(%arg0: i32) -> (i32, i32) {
    %c0_i32 = arith.constant 0 : i32
    %c0_i32_0 = arith.constant 0 : i32
    %c0_i32_1 = arith.constant 0 : i32
    return %c0_i32, %c0_i32_0 : i32, i32
  }
}

</mosaic_0001>

<llo_original>
// kernel: tpu_custom_call.1
$region0: #{tpu_custom_call.1}
  #allocation0 [shape = 'u32[]', space=smem, size = 0x4, offset = 0x4, fixed_abs, tag = 'smem constant byte address 0x4 - core index']
  #allocation1 [shape = 'u32[72,128]{1,0:T(1,128)}', space=vmem, size = 0x9000, scoped, tag = 'internal scratch']
  #allocation2 [shape = 'f32[2,18,128]{2,1,0:T(8,128)}', space=vmem, size = 0x6000, scoped, tag = 'scratch operand']
  #allocation3 [shape = 'f32[2,8,2,128]{3,2,1,0:T(2,128)}', space=vmem, size = 0x4000, scoped, tag = 'scratch operand']
  %s0 = inlined_call_operand.vmem [shape: f32[2,18,64], index: 0, kind: input, shape index: {}]
  %s1 = inlined_call_operand.vmem [shape: f32[2,10,48], index: 1, kind: input, shape index: {}]
  %s2 = inlined_call_operand.hbm [shape: f32[3,64,128], index: 2, kind: input, shape index: {}]
  %s3 = inlined_call_operand.vmem [shape: f32[3,48,256], index: 3, kind: input, shape index: {}]
  %s4 = inlined_call_operand.hbm [shape: f32[3,128,256], index: 4, kind: input, shape index: {}]
  %s5 = inlined_call_operand.vmem [shape: f32[4,256], index: 5, kind: input, shape index: {}]
  %s6 = inlined_call_operand.vmem [shape: f32[256,8], index: 6, kind: input, shape index: {}]
  %s7 = inlined_call_operand.vmem [shape: f32[8,256], index: 7, kind: input, shape index: {}]
  %s8 = inlined_call_operand.hbm [shape: f32[32,128], index: 8, kind: output, shape index: {}]
  %s9 = sld [smem:[#allocation0]]
  $region50: #{tpu_custom_call.1} parent=0
    _
  %s11 = ssub.s32 1, %s9
  %s12 = scalar_select 0, %s11, %s9
  $region1: #{tpu_custom_call.1} parent=0
    #allocation4 [shape = 'u8[98304]{0}', space=vmem, size = 0x18000, scoped, tag = 'input window, operand 2, single buffered']
    #allocation5 [shape = 's32[1]{0}', space=sflag, size = 0x4, scoped, tag = 'scoped memory for tpu_custom_call.1']
    #allocation6 [shape = 's32[1]{0}', space=sflag, size = 0x4, scoped, tag = 'scoped memory for tpu_custom_call.1']
    #allocation7 [shape = 'u8[393216]{0}', space=vmem, size = 0x60000, scoped, tag = 'input window, operand 4, single buffered']
    #allocation8 [shape = 's32[1]{0}', space=sflag, size = 0x4, scoped, tag = 'scoped memory for tpu_custom_call.1']
    #allocation9 [shape = 'u8[16384]{0}', space=vmem, size = 0x4000, scoped, tag = 'output window, operand 0, single buffered']
    %13 = vsyncpa [#allocation5], 0
    %14 = vsyncpa [#allocation8], 0
    %15 = vsyncpa [#allocation6], 0
    // Predicated region
    $region2: #{tpu_custom_call.1} parent=1 // pred_check
      _
    $region3: #{tpu_custom_call.1} parent=1 // pred_check_branch
      %17 = sbr.rel (0) target = $region5
    $region4: #{tpu_custom_call.1} parent=1 // pred_region
      _
    $region5: #{tpu_custom_call.1} parent=1 // pred_fallthru
      _
    // Predicated region
    $region6: #{tpu_custom_call.1} parent=1 // pred_check
      _
    $region7: #{tpu_custom_call.1} parent=1 // pred_check_branch
      %19 = sbr.rel (0) target = $region9
    $region8: #{tpu_custom_call.1} parent=1 // pred_region
      _
    $region9: #{tpu_custom_call.1} parent=1 // pred_fallthru
      _
    // Predicated region
    $region10: #{tpu_custom_call.1} parent=1 // pred_check
      _
    $region11: #{tpu_custom_call.1} parent=1 // pred_check_branch
      %21 = sbr.rel (0) target = $region13
    $region12: #{tpu_custom_call.1} parent=1 // pred_region
      %23 = vsyncadd [#allocation5], 0
      %s24 = sshll.u32 %s2, 4
      %s25 = int_to_ptr.hbm [resolvable:$true] %s24
      %s26 = sshll.u32 [#allocation4], 4
      %s27 = int_to_ptr.vmem [resolvable:$true] %s26
      %32 = dma.hbm_to_vmem [thread:$0]  %s25, 3072, %s27, [#allocation5], 128, 128, 8
    $region13: #{tpu_custom_call.1} parent=1 // pred_fallthru
      _
    // Predicated region
    $region14: #{tpu_custom_call.1} parent=1 // pred_check
      _
    $region15: #{tpu_custom_call.1} parent=1 // pred_check_branch
      %34 = sbr.rel (0) target = $region17
    $region16: #{tpu_custom_call.1} parent=1 // pred_region
      _
    $region17: #{tpu_custom_call.1} parent=1 // pred_fallthru
      _
    // Predicated region
    $region18: #{tpu_custom_call.1} parent=1 // pred_check
      _
    $region19: #{tpu_custom_call.1} parent=1 // pred_check_branch
      %36 = sbr.rel (0) target = $region21
    $region20: #{tpu_custom_call.1} parent=1 // pred_region
      %38 = vsyncadd [#allocation8], 0
      %s39 = sshll.u32 %s4, 4
      %s40 = int_to_ptr.hbm [resolvable:$true] %s39
      %s41 = sshll.u32 [#allocation7], 4
      %s42 = int_to_ptr.vmem [resolvable:$true] %s41
      %47 = dma.hbm_to_vmem [thread:$0]  %s40, 12288, %s42, [#allocation8], 256, 256, 16
    $region21: #{tpu_custom_call.1} parent=1 // pred_fallthru
      _
    // Predicated region
    $region22: #{tpu_custom_call.1} parent=1 // pred_check
      _
    $region23: #{tpu_custom_call.1} parent=1 // pred_check_branch
      %49 = sbr.rel (0) target = $region25
    $region24: #{tpu_custom_call.1} parent=1 // pred_region
      _
    $region25: #{tpu_custom_call.1} parent=1 // pred_fallthru
      _
    // Predicated region
    $region26: #{tpu_custom_call.1} parent=1 // pred_check
      _
    $region27: #{tpu_custom_call.1} parent=1 // pred_check_branch
      %51 = sbr.rel (0) target = $region29
    $region28: #{tpu_custom_call.1} parent=1 // pred_region
      _
    $region29: #{tpu_custom_call.1} parent=1 // pred_fallthru
      _
    // Predicated region
    $region30: #{tpu_custom_call.1} parent=1 // pred_check
      _
    $region31: #{tpu_custom_call.1} parent=1 // pred_check_branch
      %53 = sbr.rel (0) target = $region33
    $region32: #{tpu_custom_call.1} parent=1 // pred_region
      _
    $region33: #{tpu_custom_call.1} parent=1 // pred_fallthru
      _
    // Predicated region
    $region34: #{tpu_custom_call.1} parent=1 // pred_check
      _
    $region35: #{tpu_custom_call.1} parent=1 // pred_check_branch
      %55 = sbr.rel (0) target = $region37
    $region36: #{tpu_custom_call.1} parent=1 // pred_region
      %57 = dma.done [#allocation5], 3072
    $region37: #{tpu_custom_call.1} parent=1 // pred_fallthru
      _
    // Predicated region
    $region38: #{tpu_custom_call.1} parent=1 // pred_check
      _
    $region39: #{tpu_custom_call.1} parent=1 // pred_check_branch
      %59 = sbr.rel (0) target = $region41
    $region40: #{tpu_custom_call.1} parent=1 // pred_region
      %61 = dma.done [#allocation8], 12288
    $region41: #{tpu_custom_call.1} parent=1 // pred_fallthru
      _
    %v62 = vld [vmem:[%s0] sm:$0xff]
    %v63 = vld [vmem:[%s0 + $0x8] sm:$0xff]
    %v64 = vld [vmem:[%s0 + $0x18] sm:$0xff]
    %v65 = vld [vmem:[%s0 + $0x20] sm:$0xff]
    %v66 = vld [vmem:[#allocation4] sm:$0xff]
    %v67 = vld [vmem:[#allocation4 + $0x8] sm:$0xff]
    %v68 = vld [vmem:[#allocation4 + $0x10] sm:$0xff]
    %v69 = vld [vmem:[#allocation4 + $0x18] sm:$0xff]
    %v70 = vld [vmem:[#allocation4 + $0x20] sm:$0xff]
    %v71 = vld [vmem:[#allocation4 + $0x28] sm:$0xff]
    %v72 = vld [vmem:[#allocation4 + $0x30] sm:$0xff]
    %v73 = vld [vmem:[#allocation4 + $0x38] sm:$0xff]
    %v74 = vld [vmem:[%s0 + $0x1] sm:$0xff]
    %v75 = vld [vmem:[%s0 + $0x9] sm:$0xff]
    %v76 = vld [vmem:[%s0 + $0x19] sm:$0xff]
    %v77 = vld [vmem:[%s0 + $0x21] sm:$0xff]
    %s78 = scalar_lea.vmem [#allocation4], 64
    %v79 = vld [vmem:[%s78] sm:$0xff]
    %v80 = vld [vmem:[%s78 + $0x8] sm:$0xff]
    %v81 = vld [vmem:[%s78 + $0x10] sm:$0xff]
    %v82 = vld [vmem:[%s78 + $0x18] sm:$0xff]
    %v83 = vld [vmem:[%s78 + $0x20] sm:$0xff]
    %v84 = vld [vmem:[%s78 + $0x28] sm:$0xff]
    %v85 = vld [vmem:[%s78 + $0x30] sm:$0xff]
    %v86 = vld [vmem:[%s78 + $0x38] sm:$0xff]
    %vm87 = vcmask 523264
    %v89 = vsel %vm87, %v74, 0
    %v92 = vsel %vm87, %v75, 0
    %v95 = vsel %vm87, %v76, 0
    %v98 = vsel %vm87, %v77, 0
    %100 = vmatpush.msra.mxu0 0.0
    %101 = vmatpush.msra.mxu0 0.0
    %102 = vmatpush.msra.mxu0 0.0
    %103 = vmatpush.msra.mxu0 0.0
    %104 = vmatpush.msra.mxu0 0.0
    %105 = vmatpush.msra.mxu0 0.0
    %106 = vmatpush.msra.mxu0 0.0
    %107 = vmatpush.msra.mxu0 0.0
    %108 = vmatpush.msra.mxu0 %v86
    %109 = vmatpush.msra.mxu0 %v85
    %110 = vmatpush.msra.mxu0 %v84
    %111 = vmatpush.msra.mxu0 %v83
    %112 = vmatpush.msra.mxu0 %v82
    %113 = vmatpush.msra.mxu0 %v81
    %114 = vmatpush.msra.mxu0 %v80
    %115 = vmatpush.msra.mxu0 %v79
    %116 = vmatmul.f32.gmra.mxu0 %v89
    %v117 = vpop.f32.mrf.mxu0
    %v118 = vadd.f32 0.0, %v117
    %119 = vmatmul.f32.gmra.mxu0 %v92
    %v120 = vpop.f32.mrf.mxu0
    %v121 = vadd.f32 0.0, %v120
    %122 = vmatmul.f32.gmra.mxu0 %v95
    %v123 = vpop.f32.mrf.mxu0
    %v124 = vadd.f32 0.0, %v123
    %125 = vmatmul.f32.gmra.mxu0 %v98
    %v126 = vpop.f32.mrf.mxu0
    %v127 = vadd.f32 0.0, %v126
    %128 = vdwg.mxu0
    %v130 = vsel %vm87, %v62, 0
    %v133 = vsel %vm87, %v63, 0
    %v136 = vsel %vm87, %v64, 0
    %v139 = vsel %vm87, %v65, 0
    %141 = vmatpush.msra.mxu0 0.0
    %142 = vmatpush.msra.mxu0 0.0
    %143 = vmatpush.msra.mxu0 0.0
    %144 = vmatpush.msra.mxu0 0.0
    %145 = vmatpush.msra.mxu0 0.0
    %146 = vmatpush.msra.mxu0 0.0
    %147 = vmatpush.msra.mxu0 0.0
    %148 = vmatpush.msra.mxu0 0.0
    %149 = vmatpush.msra.mxu0 %v73
    %150 = vmatpush.msra.mxu0 %v72
    %151 = vmatpush.msra.mxu0 %v71
    %152 = vmatpush.msra.mxu0 %v70
    %153 = vmatpush.msra.mxu0 %v69
    %154 = vmatpush.msra.mxu0 %v68
    %155 = vmatpush.msra.mxu0 %v67
    %156 = vmatpush.msra.mxu0 %v66
    %157 = vmatmul.f32.gmra.mxu0 %v130
    %v158 = vpop.f32.mrf.mxu0
    %v159 = vadd.f32 %v118, %v158
    %160 = vmatmul.f32.gmra.mxu0 %v133
    %v161 = vpop.f32.mrf.mxu0
    %v162 = vadd.f32 %v121, %v161
    %163 = vmatmul.f32.gmra.mxu0 %v136
    %v164 = vpop.f32.mrf.mxu0
    %v165 = vadd.f32 %v124, %v164
    %166 = vmatmul.f32.gmra.mxu0 %v139
    %v167 = vpop.f32.mrf.mxu0
    %v168 = vadd.f32 %v127, %v167
    %169 = vdwg.mxu0
    %v170 = vld [vmem:[%s0 + $0x2] sm:$0xff]
    %v171 = vld [vmem:[%s0 + $0xa] sm:$0xff]
    %v172 = vld [vmem:[%s0 + $0x1a] sm:$0xff]
    %v173 = vld [vmem:[%s0 + $0x22] sm:$0xff]
    %s174 = scalar_lea.vmem [#allocation4], 128
    %v175 = vld [vmem:[%s174] sm:$0xff]
    %v176 = vld [vmem:[%s174 + $0x8] sm:$0xff]
    %v177 = vld [vmem:[%s174 + $0x10] sm:$0xff]
    %v178 = vld [vmem:[%s174 + $0x18] sm:$0xff]
    %v179 = vld [vmem:[%s174 + $0x20] sm:$0xff]
    %v180 = vld [vmem:[%s174 + $0x28] sm:$0xff]
    %v181 = vld [vmem:[%s174 + $0x30] sm:$0xff]
    %v182 = vld [vmem:[%s174 + $0x38] sm:$0xff]
    %v184 = vsel %vm87, %v170, 0
    %v187 = vsel %vm87, %v171, 0
    %v190 = vsel %vm87, %v172, 0
    %v193 = vsel %vm87, %v173, 0
    %195 = vmatpush.msra.mxu0 0.0
    %196 = vmatpush.msra.mxu0 0.0
    %197 = vmatpush.msra.mxu0 0.0
    %198 = vmatpush.msra.mxu0 0.0
    %199 = vmatpush.msra.mxu0 0.0
    %200 = vmatpush.msra.mxu0 0.0
    %201 = vmatpush.msra.mxu0 0.0
    %202 = vmatpush.msra.mxu0 0.0
    %203 = vmatpush.msra.mxu0 %v182
    %204 = vmatpush.msra.mxu0 %v181
    %205 = vmatpush.msra.mxu0 %v180
    %206 = vmatpush.msra.mxu0 %v179
    %207 = vmatpush.msra.mxu0 %v178
    %208 = vmatpush.msra.mxu0 %v177
    %209 = vmatpush.msra.mxu0 %v176
    %210 = vmatpush.msra.mxu0 %v175
    %211 = vmatmul.f32.gmra.mxu0 %v184
    %v212 = vpop.f32.mrf.mxu0
    %v213 = vadd.f32 0.0, %v212
    %214 = vmatmul.f32.gmra.mxu0 %v187
    %v215 = vpop.f32.mrf.mxu0
    %v216 = vadd.f32 0.0, %v215
    %217 = vmatmul.f32.gmra.mxu0 %v190
    %v218 = vpop.f32.mrf.mxu0
    %v219 = vadd.f32 0.0, %v218
    %220 = vmatmul.f32.gmra.mxu0 %v193
    %v221 = vpop.f32.mrf.mxu0
    %v222 = vadd.f32 0.0, %v221
    %223 = vdwg.mxu0
    %v224 = vadd.f32 %v159, %v213
    %v225 = vadd.f32 %v162, %v216
    %v226 = vadd.f32 %v165, %v219
    %v227 = vadd.f32 %v168, %v222
    %v228 = vld [vmem:[%s5] sm:$0x1]
    %v229 = vperm.slane %v228, 0
    %v230 = vadd.f32 %v224, %v229
    %v231 = vadd.f32 %v225, %v229
    %v232 = vadd.f32 %v226, %v229
    %v233 = vadd.f32 %v227, %v229
    %v234 = vmax.f32 %v230, 0.0
    %v235 = vmax.f32 %v231, 0.0
    %v236 = vmax.f32 %v232, 0.0
    %v237 = vmax.f32 %v233, 0.0
    %238 = vst [vmem:[#allocation2] sm:$0x1] 0.0
    %239 = vst [vmem:[#allocation2 + $0x18] sm:$0x1] 0.0
    %240 = vst [vmem:[#allocation2 + $0x11] sm:$0x1] 0.0
    %241 = vst [vmem:[#allocation2 + $0x29] sm:$0x1] 0.0
    %242 = vst [vmem:[#allocation2 + $0x1] sm:$0xff] %v234
    %243 = vst [vmem:[#allocation2 + $0x9] sm:$0xff] %v235
    %244 = vst [vmem:[#allocation2 + $0x19] sm:$0xff] %v236
    %245 = vst [vmem:[#allocation2 + $0x21] sm:$0xff] %v237
    %v246 = vld [vmem:[%s1] sm:$0xff]
    %v247 = vld [vmem:[%s1 + $0x10] sm:$0xff]
    %v248 = vld [vmem:[%s3] sm:$0xff]
    %v249 = vld [vmem:[%s3 + $0x8] sm:$0xff]
    %v250 = vld [vmem:[%s3 + $0x10] sm:$0xff]
    %v251 = vld [vmem:[%s3 + $0x18] sm:$0xff]
    %v252 = vld [vmem:[%s3 + $0x20] sm:$0xff]
    %v253 = vld [vmem:[%s3 + $0x28] sm:$0xff]
    %v254 = vld [vmem:[%s3 + $0x30] sm:$0xff]
    %v255 = vld [vmem:[%s3 + $0x38] sm:$0xff]
    %v256 = vld [vmem:[%s3 + $0x40] sm:$0xff]
    %v257 = vld [vmem:[%s3 + $0x48] sm:$0xff]
    %v258 = vld [vmem:[%s3 + $0x50] sm:$0xff]
    %v259 = vld [vmem:[%s3 + $0x58] sm:$0xff]
    %v260 = vld [vmem:[%s1 + $0x1] sm:$0xff]
    %v261 = vld [vmem:[%s1 + $0x11] sm:$0xff]
    %s262 = scalar_lea.vmem %s3, 96
    %v263 = vld [vmem:[%s262] sm:$0xff]
    %v264 = vld [vmem:[%s262 + $0x8] sm:$0xff]
    %v265 = vld [vmem:[%s262 + $0x10] sm:$0xff]
    %v266 = vld [vmem:[%s262 + $0x18] sm:$0xff]
    %v267 = vld [vmem:[%s262 + $0x20] sm:$0xff]
    %v268 = vld [vmem:[%s262 + $0x28] sm:$0xff]
    %v269 = vld [vmem:[%s262 + $0x30] sm:$0xff]
    %v270 = vld [vmem:[%s262 + $0x38] sm:$0xff]
    %v271 = vld [vmem:[%s262 + $0x40] sm:$0xff]
    %v272 = vld [vmem:[%s262 + $0x48] sm:$0xff]
    %v273 = vld [vmem:[%s262 + $0x50] sm:$0xff]
    %v274 = vld [vmem:[%s262 + $0x58] sm:$0xff]
    %vm275 = vcmask 392192
    %v277 = vsel %vm275, %v260, 0
    %v280 = vsel %vm275, %v261, 0
    %282 = vmatpush.msra.mxu0 0.0
    %283 = vmatpush.msra.mxu0 0.0
    %284 = vmatpush.msra.mxu0 0.0
    %285 = vmatpush.msra.mxu0 0.0
    %286 = vmatpush.msra.mxu0 0.0
    %287 = vmatpush.msra.mxu0 0.0
    %288 = vmatpush.msra.mxu0 0.0
    %289 = vmatpush.msra.mxu0 0.0
    %290 = vmatpush.msra.mxu0 0.0
    %291 = vmatpush.msra.mxu0 0.0
    %292 = vmatpush.msra.mxu0 %v273
    %293 = vmatpush.msra.mxu0 %v271
    %294 = vmatpush.msra.mxu0 %v269
    %295 = vmatpush.msra.mxu0 %v267
    %296 = vmatpush.msra.mxu0 %v265
    %297 = vmatpush.msra.mxu0 %v263
    %298 = vmatmul.f32.gmra.mxu0 %v277
    %v299 = vpop.f32.mrf.mxu0
    %v300 = vadd.f32 0.0, %v299
    %301 = vmatmul.f32.gmra.mxu0 %v280
    %v302 = vpop.f32.mrf.mxu0
    %v303 = vadd.f32 0.0, %v302
    %304 = vdwg.mxu0
    %305 = vmatpush.msra.mxu0 0.0
    %306 = vmatpush.msra.mxu0 0.0
    %307 = vmatpush.msra.mxu0 0.0
    %308 = vmatpush.msra.mxu0 0.0
    %309 = vmatpush.msra.mxu0 0.0
    %310 = vmatpush.msra.mxu0 0.0
    %311 = vmatpush.msra.mxu0 0.0
    %312 = vmatpush.msra.mxu0 0.0
    %313 = vmatpush.msra.mxu0 0.0
    %314 = vmatpush.msra.mxu0 0.0
    %315 = vmatpush.msra.mxu0 %v274
    %316 = vmatpush.msra.mxu0 %v272
    %317 = vmatpush.msra.mxu0 %v270
    %318 = vmatpush.msra.mxu0 %v268
    %319 = vmatpush.msra.mxu0 %v266
    %320 = vmatpush.msra.mxu0 %v264
    %321 = vmatmul.f32.gmra.mxu0 %v277
    %v322 = vpop.f32.mrf.mxu0
    %v323 = vadd.f32 0.0, %v322
    %324 = vmatmul.f32.gmra.mxu0 %v280
    %v325 = vpop.f32.mrf.mxu0
    %v326 = vadd.f32 0.0, %v325
    %327 = vdwg.mxu0
    %v329 = vsel %vm275, %v246, 0
    %v332 = vsel %vm275, %v247, 0
    %334 = vmatpush.msra.mxu0 0.0
    %335 = vmatpush.msra.mxu0 0.0
    %336 = vmatpush.msra.mxu0 0.0
    %337 = vmatpush.msra.mxu0 0.0
    %338 = vmatpush.msra.mxu0 0.0
    %339 = vmatpush.msra.mxu0 0.0
    %340 = vmatpush.msra.mxu0 0.0
    %341 = vmatpush.msra.mxu0 0.0
    %342 = vmatpush.msra.mxu0 0.0
    %343 = vmatpush.msra.mxu0 0.0
    %344 = vmatpush.msra.mxu0 %v258
    %345 = vmatpush.msra.mxu0 %v256
    %346 = vmatpush.msra.mxu0 %v254
    %347 = vmatpush.msra.mxu0 %v252
    %348 = vmatpush.msra.mxu0 %v250
    %349 = vmatpush.msra.mxu0 %v248
    %350 = vmatmul.f32.gmra.mxu0 %v329
    %v351 = vpop.f32.mrf.mxu0
    %v352 = vadd.f32 %v300, %v351
    %353 = vmatmul.f32.gmra.mxu0 %v332
    %v354 = vpop.f32.mrf.mxu0
    %v355 = vadd.f32 %v303, %v354
    %356 = vdwg.mxu0
    %357 = vmatpush.msra.mxu0 0.0
    %358 = vmatpush.msra.mxu0 0.0
    %359 = vmatpush.msra.mxu0 0.0
    %360 = vmatpush.msra.mxu0 0.0
    %361 = vmatpush.msra.mxu0 0.0
    %362 = vmatpush.msra.mxu0 0.0
    %363 = vmatpush.msra.mxu0 0.0
    %364 = vmatpush.msra.mxu0 0.0
    %365 = vmatpush.msra.mxu0 0.0
    %366 = vmatpush.msra.mxu0 0.0
    %367 = vmatpush.msra.mxu0 %v259
    %368 = vmatpush.msra.mxu0 %v257
    %369 = vmatpush.msra.mxu0 %v255
    %370 = vmatpush.msra.mxu0 %v253
    %371 = vmatpush.msra.mxu0 %v251
    %372 = vmatpush.msra.mxu0 %v249
    %373 = vmatmul.f32.gmra.mxu0 %v329
    %v374 = vpop.f32.mrf.mxu0
    %v375 = vadd.f32 %v323, %v374
    %376 = vmatmul.f32.gmra.mxu0 %v332
    %v377 = vpop.f32.mrf.mxu0
    %v378 = vadd.f32 %v326, %v377
    %379 = vdwg.mxu0
    %v380 = vld [vmem:[%s1 + $0x2] sm:$0xff]
    %v381 = vld [vmem:[%s1 + $0x12] sm:$0xff]
    %s382 = scalar_lea.vmem %s3, 192
    %v383 = vld [vmem:[%s382] sm:$0xff]
    %v384 = vld [vmem:[%s382 + $0x8] sm:$0xff]
    %v385 = vld [vmem:[%s382 + $0x10] sm:$0xff]
    %v386 = vld [vmem:[%s382 + $0x18] sm:$0xff]
    %v387 = vld [vmem:[%s382 + $0x20] sm:$0xff]
    %v388 = vld [vmem:[%s382 + $0x28] sm:$0xff]
    %v389 = vld [vmem:[%s382 + $0x30] sm:$0xff]
    %v390 = vld [vmem:[%s382 + $0x38] sm:$0xff]
    %v391 = vld [vmem:[%s382 + $0x40] sm:$0xff]
    %v392 = vld [vmem:[%s382 + $0x48] sm:$0xff]
    %v393 = vld [vmem:[%s382 + $0x50] sm:$0xff]
    %v394 = vld [vmem:[%s382 + $0x58] sm:$0xff]
    %v396 = vsel %vm275, %v380, 0
    %v399 = vsel %vm275, %v381, 0
    %401 = vmatpush.msra.mxu0 0.0
    %402 = vmatpush.msra.mxu0 0.0
    %403 = vmatpush.msra.mxu0 0.0
    %404 = vmatpush.msra.mxu0 0.0
    %405 = vmatpush.msra.mxu0 0.0
    %406 = vmatpush.msra.mxu0 0.0
    %407 = vmatpush.msra.mxu0 0.0
    %408 = vmatpush.msra.mxu0 0.0
    %409 = vmatpush.msra.mxu0 0.0
    %410 = vmatpush.msra.mxu0 0.0
    %411 = vmatpush.msra.mxu0 %v393
    %412 = vmatpush.msra.mxu0 %v391
    %413 = vmatpush.msra.mxu0 %v389
    %414 = vmatpush.msra.mxu0 %v387
    %415 = vmatpush.msra.mxu0 %v385
    %416 = vmatpush.msra.mxu0 %v383
    %417 = vmatmul.f32.gmra.mxu0 %v396
    %v418 = vpop.f32.mrf.mxu0
    %v419 = vadd.f32 0.0, %v418
    %420 = vmatmul.f32.gmra.mxu0 %v399
    %v421 = vpop.f32.mrf.mxu0
    %v422 = vadd.f32 0.0, %v421
    %423 = vdwg.mxu0
    %424 = vmatpush.msra.mxu0 0.0
    %425 = vmatpush.msra.mxu0 0.0
    %426 = vmatpush.msra.mxu0 0.0
    %427 = vmatpush.msra.mxu0 0.0
    %428 = vmatpush.msra.mxu0 0.0
    %429 = vmatpush.msra.mxu0 0.0
    %430 = vmatpush.msra.mxu0 0.0
    %431 = vmatpush.msra.mxu0 0.0
    %432 = vmatpush.msra.mxu0 0.0
    %433 = vmatpush.msra.mxu0 0.0
    %434 = vmatpush.msra.mxu0 %v394
    %435 = vmatpush.msra.mxu0 %v392
    %436 = vmatpush.msra.mxu0 %v390
    %437 = vmatpush.msra.mxu0 %v388
    %438 = vmatpush.msra.mxu0 %v386
    %439 = vmatpush.msra.mxu0 %v384
    %440 = vmatmul.f32.gmra.mxu0 %v396
    %v441 = vpop.f32.mrf.mxu0
    %v442 = vadd.f32 0.0, %v441
    %443 = vmatmul.f32.gmra.mxu0 %v399
    %v444 = vpop.f32.mrf.mxu0
    %v445 = vadd.f32 0.0, %v444
    %446 = vdwg.mxu0
    %v447 = vadd.f32 %v352, %v419
    %v448 = vadd.f32 %v375, %v442
    %v449 = vadd.f32 %v355, %v422
    %v450 = vadd.f32 %v378, %v445
    %v451 = vadd.f32 %v447, %v449
    %v452 = vrot.slane %v451, 4
    %v453 = vadd.f32 %v451, %v452
    %v454 = vrot.slane %v453, 2
    %v455 = vadd.f32 %v453, %v454
    %v456 = vrot.slane %v455, 1
    %v457 = vadd.f32 %v455, %v456
    %v458 = vadd.f32 %v448, %v450
    %v459 = vrot.slane %v458, 4
    %v460 = vadd.f32 %v458, %v459
    %v461 = vrot.slane %v460, 2
    %v462 = vadd.f32 %v460, %v461
    %v463 = vrot.slane %v462, 1
    %v464 = vadd.f32 %v462, %v463
    %v465 = vld [vmem:[%s6] sm:$0xff]
    %v466 = vld [vmem:[%s6 + $0x8] sm:$0xff]
    %v467 = vld [vmem:[%s6 + $0x10] sm:$0xff]
    %v468 = vld [vmem:[%s6 + $0x18] sm:$0xff]
    %v469 = vld [vmem:[%s6 + $0x20] sm:$0xff]
    %v470 = vld [vmem:[%s6 + $0x28] sm:$0xff]
    %v471 = vld [vmem:[%s6 + $0x30] sm:$0xff]
    %v472 = vld [vmem:[%s6 + $0x38] sm:$0xff]
    %v473 = vld [vmem:[%s6 + $0x40] sm:$0xff]
    %v474 = vld [vmem:[%s6 + $0x48] sm:$0xff]
    %v475 = vld [vmem:[%s6 + $0x50] sm:$0xff]
    %v476 = vld [vmem:[%s6 + $0x58] sm:$0xff]
    %v477 = vld [vmem:[%s6 + $0x60] sm:$0xff]
    %v478 = vld [vmem:[%s6 + $0x68] sm:$0xff]
    %v479 = vld [vmem:[%s6 + $0x70] sm:$0xff]
    %v480 = vld [vmem:[%s6 + $0x78] sm:$0xff]
    %v481 = vld [vmem:[%s6 + $0x80] sm:$0xff]
    %v482 = vld [vmem:[%s6 + $0x88] sm:$0xff]
    %v483 = vld [vmem:[%s6 + $0x90] sm:$0xff]
    %v484 = vld [vmem:[%s6 + $0x98] sm:$0xff]
    %v485 = vld [vmem:[%s6 + $0xa0] sm:$0xff]
    %v486 = vld [vmem:[%s6 + $0xa8] sm:$0xff]
    %v487 = vld [vmem:[%s6 + $0xb0] sm:$0xff]
    %v488 = vld [vmem:[%s6 + $0xb8] sm:$0xff]
    %v489 = vld [vmem:[%s6 + $0xc0] sm:$0xff]
    %v490 = vld [vmem:[%s6 + $0xc8] sm:$0xff]
    %v491 = vld [vmem:[%s6 + $0xd0] sm:$0xff]
    %v492 = vld [vmem:[%s6 + $0xd8] sm:$0xff]
    %v493 = vld [vmem:[%s6 + $0xe0] sm:$0xff]
    %v494 = vld [vmem:[%s6 + $0xe8] sm:$0xff]
    %v495 = vld [vmem:[%s6 + $0xf0] sm:$0xff]
    %v496 = vld [vmem:[%s6 + $0xf8] sm:$0xff]
    %497 = vmatpush.msra.mxu0 %v480
    %498 = vmatpush.msra.mxu0 %v479
    %499 = vmatpush.msra.mxu0 %v478
    %500 = vmatpush.msra.mxu0 %v477
    %501 = vmatpush.msra.mxu0 %v476
    %502 = vmatpush.msra.mxu0 %v475
    %503 = vmatpush.msra.mxu0 %v474
    %504 = vmatpush.msra.mxu0 %v473
    %505 = vmatpush.msra.mxu0 %v472
    %506 = vmatpush.msra.mxu0 %v471
    %507 = vmatpush.msra.mxu0 %v470
    %508 = vmatpush.msra.mxu0 %v469
    %509 = vmatpush.msra.mxu0 %v468
    %510 = vmatpush.msra.mxu0 %v467
    %511 = vmatpush.msra.mxu0 %v466
    %512 = vmatpush.msra.mxu0 %v465
    %513 = vmatmul.f32.gmra.mxu0 %v457
    %v514 = vpop.f32.mrf.mxu0
    %v515 = vadd.f32 0.0, %v514
    %516 = vdwg.mxu0
    %517 = vmatpush.msra.mxu0 %v496
    %518 = vmatpush.msra.mxu0 %v495
    %519 = vmatpush.msra.mxu0 %v494
    %520 = vmatpush.msra.mxu0 %v493
    %521 = vmatpush.msra.mxu0 %v492
    %522 = vmatpush.msra.mxu0 %v491
    %523 = vmatpush.msra.mxu0 %v490
    %524 = vmatpush.msra.mxu0 %v489
    %525 = vmatpush.msra.mxu0 %v488
    %526 = vmatpush.msra.mxu0 %v487
    %527 = vmatpush.msra.mxu0 %v486
    %528 = vmatpush.msra.mxu0 %v485
    %529 = vmatpush.msra.mxu0 %v484
    %530 = vmatpush.msra.mxu0 %v483
    %531 = vmatpush.msra.mxu0 %v482
    %532 = vmatpush.msra.mxu0 %v481
    %533 = vmatmul.f32.gmra.mxu0 %v464
    %v534 = vpop.f32.mrf.mxu0
    %v535 = vadd.f32 %v515, %v534
    %536 = vdwg.mxu0
    %v537 = vrcp.pop 512.0
    %v538 = vmul.f32 512.0, %v537
    %v539 = vsub.f32 1.0, %v538
    %v540 = vmul.f32 %v537, %v539
    %v541 = vadd.f32 %v537, %v540
    %vm542 = vweird.f32 %v537
    %v543 = vsel %vm542, %v537, %v541
    %v544 = vmul.f32 %v535, %v543
    %v545 = vld [vmem:[%s7] sm:$0xff]
    %v546 = vld [vmem:[%s7 + $0x8] sm:$0xff]
    %vm547 = vcmask 64512
    %v549 = vsel %vm547, %v544, 0
    %551 = vmatpush.msra.mxu0 0.0
    %552 = vmatpush.msra.mxu0 0.0
    %553 = vmatpush.msra.mxu0 0.0
    %554 = vmatpush.msra.mxu0 0.0
    %555 = vmatpush.msra.mxu0 0.0
    %556 = vmatpush.msra.mxu0 0.0
    %557 = vmatpush.msra.mxu0 0.0
    %558 = vmatpush.msra.mxu0 0.0
    %559 = vmatpush.msra.mxu0 0.0
    %560 = vmatpush.msra.mxu0 0.0
    %561 = vmatpush.msra.mxu0 0.0
    %562 = vmatpush.msra.mxu0 0.0
    %563 = vmatpush.msra.mxu0 0.0
    %564 = vmatpush.msra.mxu0 0.0
    %565 = vmatpush.msra.mxu0 0.0
    %566 = vmatpush.msra.mxu0 %v545
    %567 = vmatmul.f32.gmra.mxu0 %v549
    %v568 = vpop.f32.mrf.mxu0
    %v569 = vadd.f32 0.0, %v568
    %570 = vdwg.mxu0
    %571 = vmatpush.msra.mxu0 0.0
    %572 = vmatpush.msra.mxu0 0.0
    %573 = vmatpush.msra.mxu0 0.0
    %574 = vmatpush.msra.mxu0 0.0
    %575 = vmatpush.msra.mxu0 0.0
    %576 = vmatpush.msra.mxu0 0.0
    %577 = vmatpush.msra.mxu0 0.0
    %578 = vmatpush.msra.mxu0 0.0
    %579 = vmatpush.msra.mxu0 0.0
    %580 = vmatpush.msra.mxu0 0.0
    %581 = vmatpush.msra.mxu0 0.0
    %582 = vmatpush.msra.mxu0 0.0
    %583 = vmatpush.msra.mxu0 0.0
    %584 = vmatpush.msra.mxu0 0.0
    %585 = vmatpush.msra.mxu0 0.0
    %586 = vmatpush.msra.mxu0 %v546
    %587 = vmatmul.f32.gmra.mxu0 %v549
    %v588 = vpop.f32.mrf.mxu0
    %v589 = vadd.f32 0.0, %v588
    %590 = vdwg.mxu0
    %v591 = vperm.slane %v569, 0
    %v592 = vperm.slane %v589, 0
    %v593 = vsub.f32 %v447, %v591
    %v594 = vsub.f32 %v448, %v592
    %v595 = vsub.f32 %v449, %v591
    %v596 = vsub.f32 %v450, %v592
    %v597 = vmul.f32 %v593, %v593
    %v598 = vmul.f32 %v594, %v594
    %v599 = vmul.f32 %v595, %v595
    %v600 = vmul.f32 %v596, %v596
    %v601 = vadd.f32 %v597, %v599
    %v602 = vrot.slane %v601, 4
    %v603 = vadd.f32 %v601, %v602
    %v604 = vrot.slane %v603, 2
    %v605 = vadd.f32 %v603, %v604
    %v606 = vrot.slane %v605, 1
    %v607 = vadd.f32 %v605, %v606
    %v608 = vadd.f32 %v598, %v600
    %v609 = vrot.slane %v608, 4
    %v610 = vadd.f32 %v608, %v609
    %v611 = vrot.slane %v610, 2
    %v612 = vadd.f32 %v610, %v611
    %v613 = vrot.slane %v612, 1
    %v614 = vadd.f32 %v612, %v613
    %615 = vmatpush.msra.mxu0 %v480
    %616 = vmatpush.msra.mxu0 %v479
    %617 = vmatpush.msra.mxu0 %v478
    %618 = vmatpush.msra.mxu0 %v477
    %619 = vmatpush.msra.mxu0 %v476
    %620 = vmatpush.msra.mxu0 %v475
    %621 = vmatpush.msra.mxu0 %v474
    %622 = vmatpush.msra.mxu0 %v473
    %623 = vmatpush.msra.mxu0 %v472
    %624 = vmatpush.msra.mxu0 %v471
    %625 = vmatpush.msra.mxu0 %v470
    %626 = vmatpush.msra.mxu0 %v469
    %627 = vmatpush.msra.mxu0 %v468
    %628 = vmatpush.msra.mxu0 %v467
    %629 = vmatpush.msra.mxu0 %v466
    %630 = vmatpush.msra.mxu0 %v465
    %631 = vmatmul.f32.gmra.mxu0 %v607
    %v632 = vpop.f32.mrf.mxu0
    %v633 = vadd.f32 0.0, %v632
    %634 = vdwg.mxu0
    %635 = vmatpush.msra.mxu0 %v496
    %636 = vmatpush.msra.mxu0 %v495
    %637 = vmatpush.msra.mxu0 %v494
    %638 = vmatpush.msra.mxu0 %v493
    %639 = vmatpush.msra.mxu0 %v492
    %640 = vmatpush.msra.mxu0 %v491
    %641 = vmatpush.msra.mxu0 %v490
    %642 = vmatpush.msra.mxu0 %v489
    %643 = vmatpush.msra.mxu0 %v488
    %644 = vmatpush.msra.mxu0 %v487
    %645 = vmatpush.msra.mxu0 %v486
    %646 = vmatpush.msra.mxu0 %v485
    %647 = vmatpush.msra.mxu0 %v484
    %648 = vmatpush.msra.mxu0 %v483
    %649 = vmatpush.msra.mxu0 %v482
    %650 = vmatpush.msra.mxu0 %v481
    %651 = vmatmul.f32.gmra.mxu0 %v614
    %v652 = vpop.f32.mrf.mxu0
    %v653 = vadd.f32 %v633, %v652
    %654 = vdwg.mxu0
    %v655 = vmul.f32 %v653, %v543
    %v656 = vld [vmem:[%s5 + $0x2] sm:$0x1]
    %v657 = vld [vmem:[%s5 + $0x3] sm:$0x1]
    %v658 = vadd.f32 %v655, 1e-05
    %v659 = vrsqrt.pop %v658
    %v660 = vmul.f32 %v659, %v658
    %v661 = vmul.f32 %v660, %v659
    %v662 = vmul.f32 0.5, %v661
    %v663 = vsub.f32 1.5, %v662
    %v664 = vmul.f32 %v659, %v663
    %vm665 = vweird.f32 %v658
    %vm666 = vweird.f32 %v659
    %vm667 = vmor %vm665, %vm666
    %v668 = vsel %vm667, %v659, %v664
    %v669 = vmul.f32 %v656, %v668
    %v670 = vmul.f32 %v544, %v669
    %v671 = vsub.f32 %v657, %v670
    %v673 = vsel %vm547, %v669, 0
    %675 = vmatpush.msra.mxu0 0.0
    %676 = vmatpush.msra.mxu0 0.0
    %677 = vmatpush.msra.mxu0 0.0
    %678 = vmatpush.msra.mxu0 0.0
    %679 = vmatpush.msra.mxu0 0.0
    %680 = vmatpush.msra.mxu0 0.0
    %681 = vmatpush.msra.mxu0 0.0
    %682 = vmatpush.msra.mxu0 0.0
    %683 = vmatpush.msra.mxu0 0.0
    %684 = vmatpush.msra.mxu0 0.0
    %685 = vmatpush.msra.mxu0 0.0
    %686 = vmatpush.msra.mxu0 0.0
    %687 = vmatpush.msra.mxu0 0.0
    %688 = vmatpush.msra.mxu0 0.0
    %689 = vmatpush.msra.mxu0 0.0
    %690 = vmatpush.msra.mxu0 %v545
    %691 = vmatmul.f32.gmra.mxu0 %v673
    %v692 = vpop.f32.mrf.mxu0
    %v693 = vadd.f32 0.0, %v692
    %694 = vdwg.mxu0
    %695 = vmatpush.msra.mxu0 0.0
    %696 = vmatpush.msra.mxu0 0.0
    %697 = vmatpush.msra.mxu0 0.0
    %698 = vmatpush.msra.mxu0 0.0
    %699 = vmatpush.msra.mxu0 0.0
    %700 = vmatpush.msra.mxu0 0.0
    %701 = vmatpush.msra.mxu0 0.0
    %702 = vmatpush.msra.mxu0 0.0
    %703 = vmatpush.msra.mxu0 0.0
    %704 = vmatpush.msra.mxu0 0.0
    %705 = vmatpush.msra.mxu0 0.0
    %706 = vmatpush.msra.mxu0 0.0
    %707 = vmatpush.msra.mxu0 0.0
    %708 = vmatpush.msra.mxu0 0.0
    %709 = vmatpush.msra.mxu0 0.0
    %710 = vmatpush.msra.mxu0 %v546
    %711 = vmatmul.f32.gmra.mxu0 %v673
    %v712 = vpop.f32.mrf.mxu0
    %v713 = vadd.f32 0.0, %v712
    %714 = vdwg.mxu0
    %v716 = vsel %vm547, %v671, 0
    %718 = vmatpush.msra.mxu0 0.0
    %719 = vmatpush.msra.mxu0 0.0
    %720 = vmatpush.msra.mxu0 0.0
    %721 = vmatpush.msra.mxu0 0.0
    %722 = vmatpush.msra.mxu0 0.0
    %723 = vmatpush.msra.mxu0 0.0
    %724 = vmatpush.msra.mxu0 0.0
    %725 = vmatpush.msra.mxu0 0.0
    %726 = vmatpush.msra.mxu0 0.0
    %727 = vmatpush.msra.mxu0 0.0
    %728 = vmatpush.msra.mxu0 0.0
    %729 = vmatpush.msra.mxu0 0.0
    %730 = vmatpush.msra.mxu0 0.0
    %731 = vmatpush.msra.mxu0 0.0
    %732 = vmatpush.msra.mxu0 0.0
    %733 = vmatpush.msra.mxu0 %v545
    %734 = vmatmul.f32.gmra.mxu0 %v716
    %v735 = vpop.f32.mrf.mxu0
    %v736 = vadd.f32 0.0, %v735
    %737 = vdwg.mxu0
    %738 = vmatpush.msra.mxu0 0.0
    %739 = vmatpush.msra.mxu0 0.0
    %740 = vmatpush.msra.mxu0 0.0
    %741 = vmatpush.msra.mxu0 0.0
    %742 = vmatpush.msra.mxu0 0.0
    %743 = vmatpush.msra.mxu0 0.0
    %744 = vmatpush.msra.mxu0 0.0
    %745 = vmatpush.msra.mxu0 0.0
    %746 = vmatpush.msra.mxu0 0.0
    %747 = vmatpush.msra.mxu0 0.0
    %748 = vmatpush.msra.mxu0 0.0
    %749 = vmatpush.msra.mxu0 0.0
    %750 = vmatpush.msra.mxu0 0.0
    %751 = vmatpush.msra.mxu0 0.0
    %752 = vmatpush.msra.mxu0 0.0
    %753 = vmatpush.msra.mxu0 %v546
    %754 = vmatmul.f32.gmra.mxu0 %v716
    %v755 = vpop.f32.mrf.mxu0
    %v756 = vadd.f32 0.0, %v755
    %757 = vdwg.mxu0
    %v758 = vperm.slane %v693, 0
    %v759 = vperm.slane %v713, 0
    %v760 = vmul.f32 %v447, %v758
    %v761 = vmul.f32 %v448, %v759
    %v762 = vmul.f32 %v449, %v758
    %v763 = vmul.f32 %v450, %v759
    %v764 = vperm.slane %v736, 0
    %v765 = vperm.slane %v756, 0
    %v766 = vadd.f32 %v760, %v764
    %v767 = vadd.f32 %v761, %v765
    %v768 = vadd.f32 %v762, %v764
    %v769 = vadd.f32 %v763, %v765
    %v772 = vrot.slane %v766, 1
    %v773 = vrot.slane %v766, 2
    %v774 = vrot.slane %v766, 3
    %v775 = vrot.slane %v766, 4
    %v776 = vrot.slane %v766, 5
    %v777 = vrot.slane %v766, 6
    %v778 = vrot.slane %v766, 7
    %v779 = vrot.slane %v768, 1
    %v780 = vrot.slane %v768, 2
    %v781 = vrot.slane %v768, 3
    %v782 = vrot.slane %v768, 4
    %v783 = vrot.slane %v768, 5
    %v784 = vrot.slane %v768, 6
    %v785 = vrot.slane %v768, 7
    %800 = vst [vmem:[#allocation3] sm:$0x1] %v766
    %801 = vst [vmem:[#allocation3 + $0x2] sm:$0x1] %v772
    %802 = vst [vmem:[#allocation3 + $0x4] sm:$0x1] %v773
    %803 = vst [vmem:[#allocation3 + $0x6] sm:$0x1] %v774
    %804 = vst [vmem:[#allocation3 + $0x8] sm:$0x1] %v775
    %805 = vst [vmem:[#allocation3 + $0xa] sm:$0x1] %v776
    %806 = vst [vmem:[#allocation3 + $0xc] sm:$0x1] %v777
    %807 = vst [vmem:[#allocation3 + $0xe] sm:$0x1] %v778
    %808 = vst [vmem:[#allocation3 + $0x10] sm:$0x1] %v768
    %809 = vst [vmem:[#allocation3 + $0x12] sm:$0x1] %v779
    %810 = vst [vmem:[#allocation3 + $0x14] sm:$0x1] %v780
    %811 = vst [vmem:[#allocation3 + $0x16] sm:$0x1] %v781
    %812 = vst [vmem:[#allocation3 + $0x18] sm:$0x1] %v782
    %813 = vst [vmem:[#allocation3 + $0x1a] sm:$0x1] %v783
    %814 = vst [vmem:[#allocation3 + $0x1c] sm:$0x1] %v784
    %815 = vst [vmem:[#allocation3 + $0x1e] sm:$0x1] %v785
    %v818 = vrot.slane %v767, 1
    %v819 = vrot.slane %v767, 2
    %v820 = vrot.slane %v767, 3
    %v821 = vrot.slane %v767, 4
    %v822 = vrot.slane %v767, 5
    %v823 = vrot.slane %v767, 6
    %v824 = vrot.slane %v767, 7
    %v825 = vrot.slane %v769, 1
    %v826 = vrot.slane %v769, 2
    %v827 = vrot.slane %v769, 3
    %v828 = vrot.slane %v769, 4
    %v829 = vrot.slane %v769, 5
    %v830 = vrot.slane %v769, 6
    %v831 = vrot.slane %v769, 7
    %846 = vst [vmem:[#allocation3 + $0x1] sm:$0x1] %v767
    %847 = vst [vmem:[#allocation3 + $0x3] sm:$0x1] %v818
    %848 = vst [vmem:[#allocation3 + $0x5] sm:$0x1] %v819
    %849 = vst [vmem:[#allocation3 + $0x7] sm:$0x1] %v820
    %850 = vst [vmem:[#allocation3 + $0x9] sm:$0x1] %v821
    %851 = vst [vmem:[#allocation3 + $0xb] sm:$0x1] %v822
    %852 = vst [vmem:[#allocation3 + $0xd] sm:$0x1] %v823
    %853 = vst [vmem:[#allocation3 + $0xf] sm:$0x1] %v824
    %854 = vst [vmem:[#allocation3 + $0x11] sm:$0x1] %v769
    %855 = vst [vmem:[#allocation3 + $0x13] sm:$0x1] %v825
    %856 = vst [vmem:[#allocation3 + $0x15] sm:$0x1] %v826
    %857 = vst [vmem:[#allocation3 + $0x17] sm:$0x1] %v827
    %858 = vst [vmem:[#allocation3 + $0x19] sm:$0x1] %v828
    %859 = vst [vmem:[#allocation3 + $0x1b] sm:$0x1] %v829
    %860 = vst [vmem:[#allocation3 + $0x1d] sm:$0x1] %v830
    %861 = vst [vmem:[#allocation3 + $0x1f] sm:$0x1] %v831
    %v862 = vld [vmem:[#allocation3] sm:$0x3]
    %v863 = vld [vmem:[#allocation3 + $0x2] sm:$0x3]
    %v864 = vld [vmem:[#allocation3 + $0x4] sm:$0x3]
    %v865 = vld [vmem:[#allocation3 + $0x6] sm:$0x3]
    %v866 = vld [vmem:[#allocation3 + $0x8] sm:$0x3]
    %v867 = vld [vmem:[#allocation3 + $0xa] sm:$0x3]
    %v868 = vld [vmem:[#allocation3 + $0xc] sm:$0x3]
    %v869 = vld [vmem:[#allocation3 + $0xe] sm:$0x3]
    %v870 = vld [vmem:[#allocation3 + $0x10] sm:$0x3]
    %v871 = vld [vmem:[#allocation3 + $0x12] sm:$0x3]
    %v872 = vld [vmem:[#allocation3 + $0x14] sm:$0x3]
    %v873 = vld [vmem:[#allocation3 + $0x16] sm:$0x3]
    %v874 = vld [vmem:[#allocation3 + $0x18] sm:$0x3]
    %v875 = vld [vmem:[#allocation3 + $0x1a] sm:$0x3]
    %v876 = vld [vmem:[#allocation3 + $0x1c] sm:$0x3]
    %v877 = vld [vmem:[#allocation3 + $0x1e] sm:$0x3]
    %v878 = vld [vmem:[#allocation2] sm:$0xff]
    %v879 = vld [vmem:[#allocation2 + $0x8] sm:$0xff]
    %v880 = vld [vmem:[#allocation2 + $0x18] sm:$0xff]
    %v881 = vld [vmem:[#allocation2 + $0x20] sm:$0xff]
    %v882 = vld [vmem:[#allocation7] sm:$0xff]
    %v883 = vld [vmem:[#allocation7 + $0x8] sm:$0xff]
    %v884 = vld [vmem:[#allocation7 + $0x10] sm:$0xff]
    %v885 = vld [vmem:[#allocation7 + $0x18] sm:$0xff]
    %v886 = vld [vmem:[#allocation7 + $0x20] sm:$0xff]
    %v887 = vld [vmem:[#allocation7 + $0x28] sm:$0xff]
    %v888 = vld [vmem:[#allocation7 + $0x30] sm:$0xff]
    %v889 = vld [vmem:[#allocation7 + $0x38] sm:$0xff]
    %v890 = vld [vmem:[#allocation7 + $0x40] sm:$0xff]
    %v891 = vld [vmem:[#allocation7 + $0x48] sm:$0xff]
    %v892 = vld [vmem:[#allocation7 + $0x50] sm:$0xff]
    %v893 = vld [vmem:[#allocation7 + $0x58] sm:$0xff]
    %v894 = vld [vmem:[#allocation7 + $0x60] sm:$0xff]
    %v895 = vld [vmem:[#allocation7 + $0x68] sm:$0xff]
    %v896 = vld [vmem:[#allocation7 + $0x70] sm:$0xff]
    %v897 = vld [vmem:[#allocation7 + $0x78] sm:$0xff]
    %v898 = vld [vmem:[#allocation7 + $0x80] sm:$0xff]
    %v899 = vld [vmem:[#allocation7 + $0x88] sm:$0xff]
    %v900 = vld [vmem:[#allocation7 + $0x90] sm:$0xff]
    %v901 = vld [vmem:[#allocation7 + $0x98] sm:$0xff]
    %v902 = vld [vmem:[#allocation7 + $0xa0] sm:$0xff]
    %v903 = vld [vmem:[#allocation7 + $0xa8] sm:$0xff]
    %v904 = vld [vmem:[#allocation7 + $0xb0] sm:$0xff]
    %v905 = vld [vmem:[#allocation7 + $0xb8] sm:$0xff]
    %v906 = vld [vmem:[#allocation7 + $0xc0] sm:$0xff]
    %v907 = vld [vmem:[#allocation7 + $0xc8] sm:$0xff]
    %v908 = vld [vmem:[#allocation7 + $0xd0] sm:$0xff]
    %v909 = vld [vmem:[#allocation7 + $0xd8] sm:$0xff]
    %v910 = vld [vmem:[#allocation7 + $0xe0] sm:$0xff]
    %v911 = vld [vmem:[#allocation7 + $0xe8] sm:$0xff]
    %v912 = vld [vmem:[#allocation7 + $0xf0] sm:$0xff]
    %v913 = vld [vmem:[#allocation7 + $0xf8] sm:$0xff]
    %v914 = vld [vmem:[#allocation2 + $0x1] sm:$0xff]
    %v915 = vld [vmem:[#allocation2 + $0x9] sm:$0xff]
    %v916 = vld [vmem:[#allocation2 + $0x19] sm:$0xff]
    %v917 = vld [vmem:[#allocation2 + $0x21] sm:$0xff]
    %s918 = scalar_lea.vmem [#allocation7], 256
    %v919 = vld [vmem:[%s918] sm:$0xff]
    %v920 = vld [vmem:[%s918 + $0x8] sm:$0xff]
    %v921 = vld [vmem:[%s918 + $0x10] sm:$0xff]
    %v922 = vld [vmem:[%s918 + $0x18] sm:$0xff]
    %v923 = vld [vmem:[%s918 + $0x20] sm:$0xff]
    %v924 = vld [vmem:[%s918 + $0x28] sm:$0xff]
    %v925 = vld [vmem:[%s918 + $0x30] sm:$0xff]
    %v926 = vld [vmem:[%s918 + $0x38] sm:$0xff]
    %v927 = vld [vmem:[%s918 + $0x40] sm:$0xff]
    %v928 = vld [vmem:[%s918 + $0x48] sm:$0xff]
    %v929 = vld [vmem:[%s918 + $0x50] sm:$0xff]
    %v930 = vld [vmem:[%s918 + $0x58] sm:$0xff]
    %v931 = vld [vmem:[%s918 + $0x60] sm:$0xff]
    %v932 = vld [vmem:[%s918 + $0x68] sm:$0xff]
    %v933 = vld [vmem:[%s918 + $0x70] sm:$0xff]
    %v934 = vld [vmem:[%s918 + $0x78] sm:$0xff]
    %v935 = vld [vmem:[%s918 + $0x80] sm:$0xff]
    %v936 = vld [vmem:[%s918 + $0x88] sm:$0xff]
    %v937 = vld [vmem:[%s918 + $0x90] sm:$0xff]
    %v938 = vld [vmem:[%s918 + $0x98] sm:$0xff]
    %v939 = vld [vmem:[%s918 + $0xa0] sm:$0xff]
    %v940 = vld [vmem:[%s918 + $0xa8] sm:$0xff]
    %v941 = vld [vmem:[%s918 + $0xb0] sm:$0xff]
    %v942 = vld [vmem:[%s918 + $0xb8] sm:$0xff]
    %v943 = vld [vmem:[%s918 + $0xc0] sm:$0xff]
    %v944 = vld [vmem:[%s918 + $0xc8] sm:$0xff]
    %v945 = vld [vmem:[%s918 + $0xd0] sm:$0xff]
    %v946 = vld [vmem:[%s918 + $0xd8] sm:$0xff]
    %v947 = vld [vmem:[%s918 + $0xe0] sm:$0xff]
    %v948 = vld [vmem:[%s918 + $0xe8] sm:$0xff]
    %v949 = vld [vmem:[%s918 + $0xf0] sm:$0xff]
    %v950 = vld [vmem:[%s918 + $0xf8] sm:$0xff]
    %951 = vmatpush.msra.mxu0 %v949
    %952 = vmatpush.msra.mxu0 %v947
    %953 = vmatpush.msra.mxu0 %v945
    %954 = vmatpush.msra.mxu0 %v943
    %955 = vmatpush.msra.mxu0 %v941
    %956 = vmatpush.msra.mxu0 %v939
    %957 = vmatpush.msra.mxu0 %v937
    %958 = vmatpush.msra.mxu0 %v935
    %959 = vmatpush.msra.mxu0 %v933
    %960 = vmatpush.msra.mxu0 %v931
    %961 = vmatpush.msra.mxu0 %v929
    %962 = vmatpush.msra.mxu0 %v927
    %963 = vmatpush.msra.mxu0 %v925
    %964 = vmatpush.msra.mxu0 %v923
    %965 = vmatpush.msra.mxu0 %v921
    %966 = vmatpush.msra.mxu0 %v919
    %967 = vmatmul.f32.gmra.mxu0 %v914
    %v968 = vpop.f32.mrf.mxu0
    %v969 = vadd.f32 0.0, %v968
    %970 = vmatmul.f32.gmra.mxu0 %v915
    %v971 = vpop.f32.mrf.mxu0
    %v972 = vadd.f32 0.0, %v971
    %973 = vmatmul.f32.gmra.mxu0 %v916
    %v974 = vpop.f32.mrf.mxu0
    %v975 = vadd.f32 0.0, %v974
    %976 = vmatmul.f32.gmra.mxu0 %v917
    %v977 = vpop.f32.mrf.mxu0
    %v978 = vadd.f32 0.0, %v977
    %979 = vdwg.mxu0
    %980 = vmatpush.msra.mxu0 %v950
    %981 = vmatpush.msra.mxu0 %v948
    %982 = vmatpush.msra.mxu0 %v946
    %983 = vmatpush.msra.mxu0 %v944
    %984 = vmatpush.msra.mxu0 %v942
    %985 = vmatpush.msra.mxu0 %v940
    %986 = vmatpush.msra.mxu0 %v938
    %987 = vmatpush.msra.mxu0 %v936
    %988 = vmatpush.msra.mxu0 %v934
    %989 = vmatpush.msra.mxu0 %v932
    %990 = vmatpush.msra.mxu0 %v930
    %991 = vmatpush.msra.mxu0 %v928
    %992 = vmatpush.msra.mxu0 %v926
    %993 = vmatpush.msra.mxu0 %v924
    %994 = vmatpush.msra.mxu0 %v922
    %995 = vmatpush.msra.mxu0 %v920
    %996 = vmatmul.f32.gmra.mxu0 %v914
    %v997 = vpop.f32.mrf.mxu0
    %v998 = vadd.f32 0.0, %v997
    %999 = vmatmul.f32.gmra.mxu0 %v915
    %v1000 = vpop.f32.mrf.mxu0
    %v1001 = vadd.f32 0.0, %v1000
    %1002 = vmatmul.f32.gmra.mxu0 %v916
    %v1003 = vpop.f32.mrf.mxu0
    %v1004 = vadd.f32 0.0, %v1003
    %1005 = vmatmul.f32.gmra.mxu0 %v917
    %v1006 = vpop.f32.mrf.mxu0
    %v1007 = vadd.f32 0.0, %v1006
    %1008 = vdwg.mxu0
    %1009 = vmatpush.msra.mxu0 %v912
    %1010 = vmatpush.msra.mxu0 %v910
    %1011 = vmatpush.msra.mxu0 %v908
    %1012 = vmatpush.msra.mxu0 %v906
    %1013 = vmatpush.msra.mxu0 %v904
    %1014 = vmatpush.msra.mxu0 %v902
    %1015 = vmatpush.msra.mxu0 %v900
    %1016 = vmatpush.msra.mxu0 %v898
    %1017 = vmatpush.msra.mxu0 %v896
    %1018 = vmatpush.msra.mxu0 %v894
    %1019 = vmatpush.msra.mxu0 %v892
    %1020 = vmatpush.msra.mxu0 %v890
    %1021 = vmatpush.msra.mxu0 %v888
    %1022 = vmatpush.msra.mxu0 %v886
    %1023 = vmatpush.msra.mxu0 %v884
    %1024 = vmatpush.msra.mxu0 %v882
    %1025 = vmatmul.f32.gmra.mxu0 %v878
    %v1026 = vpop.f32.mrf.mxu0
    %v1027 = vadd.f32 %v969, %v1026
    %1028 = vmatmul.f32.gmra.mxu0 %v879
    %v1029 = vpop.f32.mrf.mxu0
    %v1030 = vadd.f32 %v972, %v1029
    %1031 = vmatmul.f32.gmra.mxu0 %v880
    %v1032 = vpop.f32.mrf.mxu0
    %v1033 = vadd.f32 %v975, %v1032
    %1034 = vmatmul.f32.gmra.mxu0 %v881
    %v1035 = vpop.f32.mrf.mxu0
    %v1036 = vadd.f32 %v978, %v1035
    %1037 = vdwg.mxu0
    %1038 = vmatpush.msra.mxu0 %v913
    %1039 = vmatpush.msra.mxu0 %v911
    %1040 = vmatpush.msra.mxu0 %v909
    %1041 = vmatpush.msra.mxu0 %v907
    %1042 = vmatpush.msra.mxu0 %v905
    %1043 = vmatpush.msra.mxu0 %v903
    %1044 = vmatpush.msra.mxu0 %v901
    %1045 = vmatpush.msra.mxu0 %v899
    %1046 = vmatpush.msra.mxu0 %v897
    %1047 = vmatpush.msra.mxu0 %v895
    %1048 = vmatpush.msra.mxu0 %v893
    %1049 = vmatpush.msra.mxu0 %v891
    %1050 = vmatpush.msra.mxu0 %v889
    %1051 = vmatpush.msra.mxu0 %v887
    %1052 = vmatpush.msra.mxu0 %v885
    %1053 = vmatpush.msra.mxu0 %v883
    %1054 = vmatmul.f32.gmra.mxu0 %v878
    %v1055 = vpop.f32.mrf.mxu0
    %v1056 = vadd.f32 %v998, %v1055
    %1057 = vmatmul.f32.gmra.mxu0 %v879
    %v1058 = vpop.f32.mrf.mxu0
    %v1059 = vadd.f32 %v1001, %v1058
    %1060 = vmatmul.f32.gmra.mxu0 %v880
    %v1061 = vpop.f32.mrf.mxu0
    %v1062 = vadd.f32 %v1004, %v1061
    %1063 = vmatmul.f32.gmra.mxu0 %v881
    %v1064 = vpop.f32.mrf.mxu0
    %v1065 = vadd.f32 %v1007, %v1064
    %1066 = vdwg.mxu0
    %v1067 = vld [vmem:[#allocation2 + $0x2] sm:$0xff]
    %v1068 = vld [vmem:[#allocation2 + $0xa] sm:$0xff]
    %v1069 = vld [vmem:[#allocation2 + $0x1a] sm:$0xff]
    %v1070 = vld [vmem:[#allocation2 + $0x22] sm:$0xff]
    %s1071 = scalar_lea.vmem [#allocation7], 512
    %v1072 = vld [vmem:[%s1071] sm:$0xff]
    %v1073 = vld [vmem:[%s1071 + $0x8] sm:$0xff]
    %v1074 = vld [vmem:[%s1071 + $0x10] sm:$0xff]
    %v1075 = vld [vmem:[%s1071 + $0x18] sm:$0xff]
    %v1076 = vld [vmem:[%s1071 + $0x20] sm:$0xff]
    %v1077 = vld [vmem:[%s1071 + $0x28] sm:$0xff]
    %v1078 = vld [vmem:[%s1071 + $0x30] sm:$0xff]
    %v1079 = vld [vmem:[%s1071 + $0x38] sm:$0xff]
    %v1080 = vld [vmem:[%s1071 + $0x40] sm:$0xff]
    %v1081 = vld [vmem:[%s1071 + $0x48] sm:$0xff]
    %v1082 = vld [vmem:[%s1071 + $0x50] sm:$0xff]
    %v1083 = vld [vmem:[%s1071 + $0x58] sm:$0xff]
    %v1084 = vld [vmem:[%s1071 + $0x60] sm:$0xff]
    %v1085 = vld [vmem:[%s1071 + $0x68] sm:$0xff]
    %v1086 = vld [vmem:[%s1071 + $0x70] sm:$0xff]
    %v1087 = vld [vmem:[%s1071 + $0x78] sm:$0xff]
    %v1088 = vld [vmem:[%s1071 + $0x80] sm:$0xff]
    %v1089 = vld [vmem:[%s1071 + $0x88] sm:$0xff]
    %v1090 = vld [vmem:[%s1071 + $0x90] sm:$0xff]
    %v1091 = vld [vmem:[%s1071 + $0x98] sm:$0xff]
    %v1092 = vld [vmem:[%s1071 + $0xa0] sm:$0xff]
    %v1093 = vld [vmem:[%s1071 + $0xa8] sm:$0xff]
    %v1094 = vld [vmem:[%s1071 + $0xb0] sm:$0xff]
    %v1095 = vld [vmem:[%s1071 + $0xb8] sm:$0xff]
    %v1096 = vld [vmem:[%s1071 + $0xc0] sm:$0xff]
    %v1097 = vld [vmem:[%s1071 + $0xc8] sm:$0xff]
    %v1098 = vld [vmem:[%s1071 + $0xd0] sm:$0xff]
    %v1099 = vld [vmem:[%s1071 + $0xd8] sm:$0xff]
    %v1100 = vld [vmem:[%s1071 + $0xe0] sm:$0xff]
    %v1101 = vld [vmem:[%s1071 + $0xe8] sm:$0xff]
    %v1102 = vld [vmem:[%s1071 + $0xf0] sm:$0xff]
    %v1103 = vld [vmem:[%s1071 + $0xf8] sm:$0xff]
    %1104 = vmatpush.msra.mxu0 %v1102
    %1105 = vmatpush.msra.mxu0 %v1100
    %1106 = vmatpush.msra.mxu0 %v1098
    %1107 = vmatpush.msra.mxu0 %v1096
    %1108 = vmatpush.msra.mxu0 %v1094
    %1109 = vmatpush.msra.mxu0 %v1092
    %1110 = vmatpush.msra.mxu0 %v1090
    %1111 = vmatpush.msra.mxu0 %v1088
    %1112 = vmatpush.msra.mxu0 %v1086
    %1113 = vmatpush.msra.mxu0 %v1084
    %1114 = vmatpush.msra.mxu0 %v1082
    %1115 = vmatpush.msra.mxu0 %v1080
    %1116 = vmatpush.msra.mxu0 %v1078
    %1117 = vmatpush.msra.mxu0 %v1076
    %1118 = vmatpush.msra.mxu0 %v1074
    %1119 = vmatpush.msra.mxu0 %v1072
    %1120 = vmatmul.f32.gmra.mxu0 %v1067
    %v1121 = vpop.f32.mrf.mxu0
    %v1122 = vadd.f32 0.0, %v1121
    %1123 = vmatmul.f32.gmra.mxu0 %v1068
    %v1124 = vpop.f32.mrf.mxu0
    %v1125 = vadd.f32 0.0, %v1124
    %1126 = vmatmul.f32.gmra.mxu0 %v1069
    %v1127 = vpop.f32.mrf.mxu0
    %v1128 = vadd.f32 0.0, %v1127
    %1129 = vmatmul.f32.gmra.mxu0 %v1070
    %v1130 = vpop.f32.mrf.mxu0
    %v1131 = vadd.f32 0.0, %v1130
    %1132 = vdwg.mxu0
    %1133 = vmatpush.msra.mxu0 %v1103
    %1134 = vmatpush.msra.mxu0 %v1101
    %1135 = vmatpush.msra.mxu0 %v1099
    %1136 = vmatpush.msra.mxu0 %v1097
    %1137 = vmatpush.msra.mxu0 %v1095
    %1138 = vmatpush.msra.mxu0 %v1093
    %1139 = vmatpush.msra.mxu0 %v1091
    %1140 = vmatpush.msra.mxu0 %v1089
    %1141 = vmatpush.msra.mxu0 %v1087
    %1142 = vmatpush.msra.mxu0 %v1085
    %1143 = vmatpush.msra.mxu0 %v1083
    %1144 = vmatpush.msra.mxu0 %v1081
    %1145 = vmatpush.msra.mxu0 %v1079
    %1146 = vmatpush.msra.mxu0 %v1077
    %1147 = vmatpush.msra.mxu0 %v1075
    %1148 = vmatpush.msra.mxu0 %v1073
    %1149 = vmatmul.f32.gmra.mxu0 %v1067
    %v1150 = vpop.f32.mrf.mxu0
    %v1151 = vadd.f32 0.0, %v1150
    %1152 = vmatmul.f32.gmra.mxu0 %v1068
    %v1153 = vpop.f32.mrf.mxu0
    %v1154 = vadd.f32 0.0, %v1153
    %1155 = vmatmul.f32.gmra.mxu0 %v1069
    %v1156 = vpop.f32.mrf.mxu0
    %v1157 = vadd.f32 0.0, %v1156
    %1158 = vmatmul.f32.gmra.mxu0 %v1070
    %v1159 = vpop.f32.mrf.mxu0
    %v1160 = vadd.f32 0.0, %v1159
    %1161 = vdwg.mxu0
    %v1162 = vadd.f32 %v1027, %v1122
    %v1163 = vadd.f32 %v1056, %v1151
    %v1164 = vadd.f32 %v1030, %v1125
    %v1165 = vadd.f32 %v1059, %v1154
    %v1166 = vadd.f32 %v1033, %v1128
    %v1167 = vadd.f32 %v1062, %v1157
    %v1168 = vadd.f32 %v1036, %v1131
    %v1169 = vadd.f32 %v1065, %v1160
    %s1170 = scalar_lea.vmem %s5, 1
    %v1171 = vld [vmem:[%s1170] ss:$4 sm:$0x3]
    %v1173 = vperm.slane %v1171, 0
    %v1174 = vperm.slane %v1171, 1
    %v1177 = vadd.f32 %v1162, %v1173
    %v1178 = vadd.f32 %v1163, %v1174
    %v1179 = vadd.f32 %v1164, %v1173
    %v1180 = vadd.f32 %v1165, %v1174
    %v1181 = vadd.f32 %v1166, %v1173
    %v1182 = vadd.f32 %v1167, %v1174
    %v1183 = vadd.f32 %v1168, %v1173
    %v1184 = vadd.f32 %v1169, %v1174
    %v1189 = vrot.slane %v1178, 2
    %v1190 = vrot.slane %v1178, 4
    %v1191 = vrot.slane %v1178, 6
    %v1192 = vrot.slane %v1180, 2
    %v1193 = vrot.slane %v1180, 4
    %v1194 = vrot.slane %v1180, 6
    %v1195 = vrot.slane %v1182, 2
    %v1196 = vrot.slane %v1182, 4
    %v1197 = vrot.slane %v1182, 6
    %v1198 = vrot.slane %v1184, 2
    %v1199 = vrot.slane %v1184, 4
    %v1200 = vrot.slane %v1184, 6
    %v1213 = vmul.f32 %v862, %v1178
    %v1214 = vmul.f32 %v863, %v1189
    %v1215 = vmul.f32 %v864, %v1190
    %v1216 = vmul.f32 %v865, %v1191
    %v1217 = vmul.f32 %v866, %v1180
    %v1218 = vmul.f32 %v867, %v1192
    %v1219 = vmul.f32 %v868, %v1193
    %v1220 = vmul.f32 %v869, %v1194
    %v1221 = vmul.f32 %v870, %v1182
    %v1222 = vmul.f32 %v871, %v1195
    %v1223 = vmul.f32 %v872, %v1196
    %v1224 = vmul.f32 %v873, %v1197
    %v1225 = vmul.f32 %v874, %v1184
    %v1226 = vmul.f32 %v875, %v1198
    %v1227 = vmul.f32 %v876, %v1199
    %v1228 = vmul.f32 %v877, %v1200
    %v1233 = vrot.slane %v1177, 2
    %v1234 = vrot.slane %v1177, 4
    %v1235 = vrot.slane %v1177, 6
    %v1236 = vrot.slane %v1179, 2
    %v1237 = vrot.slane %v1179, 4
    %v1238 = vrot.slane %v1179, 6
    %v1239 = vrot.slane %v1181, 2
    %v1240 = vrot.slane %v1181, 4
    %v1241 = vrot.slane %v1181, 6
    %v1242 = vrot.slane %v1183, 2
    %v1243 = vrot.slane %v1183, 4
    %v1244 = vrot.slane %v1183, 6
    %v1257 = vadd.f32 %v1213, %v1177
    %v1258 = vadd.f32 %v1214, %v1233
    %v1259 = vadd.f32 %v1215, %v1234
    %v1260 = vadd.f32 %v1216, %v1235
    %v1261 = vadd.f32 %v1217, %v1179
    %v1262 = vadd.f32 %v1218, %v1236
    %v1263 = vadd.f32 %v1219, %v1237
    %v1264 = vadd.f32 %v1220, %v1238
    %v1265 = vadd.f32 %v1221, %v1181
    %v1266 = vadd.f32 %v1222, %v1239
    %v1267 = vadd.f32 %v1223, %v1240
    %v1268 = vadd.f32 %v1224, %v1241
    %v1269 = vadd.f32 %v1225, %v1183
    %v1270 = vadd.f32 %v1226, %v1242
    %v1271 = vadd.f32 %v1227, %v1243
    %v1272 = vadd.f32 %v1228, %v1244
    %vm1273 = vcmp.ge.f32.partialorder %v1257, 0.0
    %vm1274 = vcmp.ge.f32.partialorder %v1258, 0.0
    %vm1275 = vcmp.ge.f32.partialorder %v1259, 0.0
    %vm1276 = vcmp.ge.f32.partialorder %v1260, 0.0
    %vm1277 = vcmp.ge.f32.partialorder %v1261, 0.0
    %vm1278 = vcmp.ge.f32.partialorder %v1262, 0.0
    %vm1279 = vcmp.ge.f32.partialorder %v1263, 0.0
    %vm1280 = vcmp.ge.f32.partialorder %v1264, 0.0
    %vm1281 = vcmp.ge.f32.partialorder %v1265, 0.0
    %vm1282 = vcmp.ge.f32.partialorder %v1266, 0.0
    %vm1283 = vcmp.ge.f32.partialorder %v1267, 0.0
    %vm1284 = vcmp.ge.f32.partialorder %v1268, 0.0
    %vm1285 = vcmp.ge.f32.partialorder %v1269, 0.0
    %vm1286 = vcmp.ge.f32.partialorder %v1270, 0.0
    %vm1287 = vcmp.ge.f32.partialorder %v1271, 0.0
    %vm1288 = vcmp.ge.f32.partialorder %v1272, 0.0
    %v1289 = vmul.f32 %v1257, 0.2
    %v1290 = vmul.f32 %v1258, 0.2
    %v1291 = vmul.f32 %v1259, 0.2
    %v1292 = vmul.f32 %v1260, 0.2
    %v1293 = vmul.f32 %v1261, 0.2
    %v1294 = vmul.f32 %v1262, 0.2
    %v1295 = vmul.f32 %v1263, 0.2
    %v1296 = vmul.f32 %v1264, 0.2
    %v1297 = vmul.f32 %v1265, 0.2
    %v1298 = vmul.f32 %v1266, 0.2
    %v1299 = vmul.f32 %v1267, 0.2
    %v1300 = vmul.f32 %v1268, 0.2
    %v1301 = vmul.f32 %v1269, 0.2
    %v1302 = vmul.f32 %v1270, 0.2
    %v1303 = vmul.f32 %v1271, 0.2
    %v1304 = vmul.f32 %v1272, 0.2
    %v1305 = vsel %vm1273, %v1257, %v1289
    %v1306 = vsel %vm1274, %v1258, %v1290
    %v1307 = vsel %vm1275, %v1259, %v1291
    %v1308 = vsel %vm1276, %v1260, %v1292
    %v1309 = vsel %vm1277, %v1261, %v1293
    %v1310 = vsel %vm1278, %v1262, %v1294
    %v1311 = vsel %vm1279, %v1263, %v1295
    %v1312 = vsel %vm1280, %v1264, %v1296
    %v1313 = vsel %vm1281, %v1265, %v1297
    %v1314 = vsel %vm1282, %v1266, %v1298
    %v1315 = vsel %vm1283, %v1267, %v1299
    %v1316 = vsel %vm1284, %v1268, %v1300
    %v1317 = vsel %vm1285, %v1269, %v1301
    %v1318 = vsel %vm1286, %v1270, %v1302
    %v1319 = vsel %vm1287, %v1271, %v1303
    %v1320 = vsel %vm1288, %v1272, %v1304
    %1337 = vst [vmem:[#allocation1] ss:$4 sm:$0xff] %v1305
    %s1338 = scalar_lea.vmem [#allocation1], 1
    %1339 = vst [vmem:[%s1338] ss:$4 sm:$0xff] %v1306
    %s1340 = scalar_lea.vmem [#allocation1], 2
    %1341 = vst [vmem:[%s1340] ss:$4 sm:$0xff] %v1307
    %s1342 = scalar_lea.vmem [#allocation1], 3
    %1343 = vst [vmem:[%s1342] ss:$4 sm:$0xff] %v1308
    %s1344 = scalar_lea.vmem [#allocation1], 32
    %1345 = vst [vmem:[%s1344] ss:$4 sm:$0xff] %v1309
    %s1346 = scalar_lea.vmem [#allocation1], 33
    %1347 = vst [vmem:[%s1346] ss:$4 sm:$0xff] %v1310
    %s1348 = scalar_lea.vmem [#allocation1], 34
    %1349 = vst [vmem:[%s1348] ss:$4 sm:$0xff] %v1311
    %s1350 = scalar_lea.vmem [#allocation1], 35
    %1351 = vst [vmem:[%s1350] ss:$4 sm:$0xff] %v1312
    %v1352 = vld.sshfl [vmem:[#allocation1] sm:$0xff pattern:$0x73625140]
    %v1353 = vld.sshfl [vmem:[#allocation1 + $0x20] sm:$0xff pattern:$0x73625140]
    %1354 = vst [vmem:[#allocation1] ss:$4 sm:$0xff] %v1313
    %1355 = vst [vmem:[%s1338] ss:$4 sm:$0xff] %v1314
    %1356 = vst [vmem:[%s1340] ss:$4 sm:$0xff] %v1315
    %1357 = vst [vmem:[%s1342] ss:$4 sm:$0xff] %v1316
    %1358 = vst [vmem:[%s1344] ss:$4 sm:$0xff] %v1317
    %1359 = vst [vmem:[%s1346] ss:$4 sm:$0xff] %v1318
    %1360 = vst [vmem:[%s1348] ss:$4 sm:$0xff] %v1319
    %1361 = vst [vmem:[%s1350] ss:$4 sm:$0xff] %v1320
    %v1362 = vld.sshfl [vmem:[#allocation1] sm:$0xff pattern:$0x73625140]
    %v1363 = vld.sshfl [vmem:[#allocation1 + $0x20] sm:$0xff pattern:$0x73625140]
    %1368 = vst [vmem:[#allocation9] sm:$0xff] %v1352
    %1369 = vst [vmem:[#allocation9 + $0x8] sm:$0xff] %v1353
    %1370 = vst [vmem:[#allocation9 + $0x10] sm:$0xff] %v1362
    %1371 = vst [vmem:[#allocation9 + $0x18] sm:$0xff] %v1363
    // Predicated region
    $region42: #{tpu_custom_call.1} parent=1 // pred_check
      _
    $region43: #{tpu_custom_call.1} parent=1 // pred_check_branch
      %1373 = sbr.rel (0) target = $region45
    $region44: #{tpu_custom_call.1} parent=1 // pred_region
      %1375 = vsyncadd [#allocation6], 0
      %s1376 = sshll.u32 [#allocation9], 4
      %s1377 = int_to_ptr.vmem [resolvable:$true] %s1376
      %s1378 = sshll.u32 %s8, 4
      %s1379 = int_to_ptr.hbm [resolvable:$true] %s1378
      %1384 = dma.vmem_to_hbm [thread:$0]  %s1377, 512, %s1379, [#allocation6], 128, 128, 8
    $region45: #{tpu_custom_call.1} parent=1 // pred_fallthru
      _
    // Predicated region
    $region46: #{tpu_custom_call.1} parent=1 // pred_check
      _
    $region47: #{tpu_custom_call.1} parent=1 // pred_check_branch
      %1386 = sbr.rel (0) target = $region49
    $region48: #{tpu_custom_call.1} parent=1 // pred_region
      %1388 = dma.done [#allocation6], 512
    $region49: #{tpu_custom_call.1} parent=1 // pred_fallthru
      _
    %1389 = vsyncpa [#allocation5], 1
    %1390 = vsyncpa [#allocation8], 1
    %1391 = vsyncpa [#allocation6], 1

</llo_original>
